<compile_context>
chip_gen: v7x
topology: tpu7x:2x2x1
jax: 0.10.0
libtpu: 0.0.40
codegen_flags: <defaults>
</compile_context>

<pallas_src>
import jax
import jax.numpy as jnp
from jax.experimental import pallas as pl
from jax.experimental.pallas import tpu as pltpu


# ----------------------------------------------------------------------------------
# Model constants (small, consistent with the forward pass)
# ----------------------------------------------------------------------------------
TIME_RANGE = 2
VIDEO_DIM = 24            # real video feature dim
HIDDEN = 32               # real hidden size
VOCAB = 128
MAX_OUT_LEN = 9           # max_output_comment_len
MAX_POS = 32

HP = 128                  # lane-padded feature width (all feature dims zero-padded to 128)
LN_EPS = 1e-12            # TODO(synk): HF-BERT LayerNorm eps; plain nn.LayerNorm default would be 1e-5

TV = 2 * TIME_RANGE + 1   # visual window length            = 5
WD = 2 * TIME_RANGE       # danmaku / kg window count       = 4
S_CROSS = 6 * TIME_RANGE + 2   # cross sequence length      = 14
L_DEC = MAX_OUT_LEN - 1   # decoder input length            = 8


# ----------------------------------------------------------------------------------
# One fused Pallas kernel: visual LN+linear -> kg linear -> cross_emb assembly
# (cls mean) -> type/loc add -> cross LN+linear -> tied-embedding vocab head -> CE.
# Grid iterates over the batch; CE sum/count accumulate in VMEM scratch.
# ----------------------------------------------------------------------------------
def _klvcg_fused_kernel(
    # per-batch activations (lane-padded to HP, pad lanes are zero)
    ivis_ref, tcls_ref, kgp_ref, tl_ref, dech_ref, lab_ref,
    # VMEM-resident weights (lane-padded with zeros)
    vg_ref, vbeta_ref, vW_ref, vbias_ref,
    kW_ref, kbias_ref,
    cg_ref, cbeta_ref, cW_ref, cbias_ref,
    emb_ref,
    # output
    loss_ref,
    # scratch
    cross_scr, nll_acc, cnt_acc,
):
    b = pl.program_id(0)

    @pl.when(b == 0)
    def _():
        nll_acc[...] = jnp.zeros_like(nll_acc)
        cnt_acc[...] = jnp.zeros_like(cnt_acc)

    # ---- 1) I_emb = visual_linear(normalize_video(I))  (LayerNorm over the REAL 24 dims) ----
    x = ivis_ref[0].astype(jnp.float32)                              # (TV, HP), pad lanes == 0
    inv_d = 1.0 / VIDEO_DIM
    mu = jnp.sum(x, axis=-1, keepdims=True) * inv_d
    ex2 = jnp.sum(x * x, axis=-1, keepdims=True) * inv_d
    var = jnp.maximum(ex2 - mu * mu, 0.0)
    xn = (x - mu) * jax.lax.rsqrt(var + LN_EPS)
    xn = xn * vg_ref[...] + vbeta_ref[...]                           # padded gamma/beta zero the pad lanes
    vis = jnp.dot(xn, vW_ref[...], preferred_element_type=jnp.float32) + vbias_ref[...]   # (TV, HP)
    # TODO(synk): VisualModel (transformer stack) is not defined in the provided source; identity pass-through.

    # TODO(synk): BertModel / DanmakuModel are not defined; pooled word embeddings stand in for time_cls.
    dan = tcls_ref[0].astype(jnp.float32)                            # (WD, HP)

    # TODO(synk): KGModel is not defined; pooled KG embeddings fused with the query via a dense projection.
    kg = jnp.dot(kgp_ref[0].astype(jnp.float32) + dan, kW_ref[...],
                 preferred_element_type=jnp.float32) + kbias_ref[...]        # (WD, HP)

    # ---- 2) cross_emb assembly (exact KLVCG.forward semantics): [cls ; visual ; danmaku ; kg] ----
    cls = (jnp.sum(vis, axis=0, keepdims=True)
           + jnp.sum(dan, axis=0, keepdims=True)
           + jnp.sum(kg, axis=0, keepdims=True)) * (1.0 / (TV + 2 * WD))     # mean over the 13 rows
    cross_scr[0:1, :] = cls
    cross_scr[1:1 + TV, :] = vis
    cross_scr[1 + TV:1 + TV + WD, :] = dan
    cross_scr[1 + TV + WD:1 + TV + 2 * WD, :] = kg

    # ---- 3) cross encoder stand-in: (cross_emb + type_emb + loc_emb) -> LayerNorm -> dense ----
    # TODO(synk): CrossModel (transformer stack) is not defined in the provided source.
    xc = cross_scr[...] + tl_ref[0]                                  # (S_CROSS, HP)
    inv_h = 1.0 / HIDDEN
    muc = jnp.sum(xc, axis=-1, keepdims=True) * inv_h
    ex2c = jnp.sum(xc * xc, axis=-1, keepdims=True) * inv_h
    varc = jnp.maximum(ex2c - muc * muc, 0.0)
    xcn = (xc - muc) * jax.lax.rsqrt(varc + LN_EPS)
    xcn = xcn * cg_ref[...] + cbeta_ref[...]
    crs = jnp.dot(xcn, cW_ref[...], preferred_element_type=jnp.float32) + cbias_ref[...]  # (S_CROSS, HP)

    # ---- 4) decoder + tied-embedding vocab head over Y[:, :-1] ----
    # TODO(synk): DecoderModel is not defined; (token + position) embeddings plus a mean-pooled
    #             encoder context stand in for cross-attention, then a tied-embedding vocab head.
    ctx = jnp.mean(crs, axis=0, keepdims=True)                       # (1, HP)
    dh = dech_ref[0].astype(jnp.float32) + ctx                       # (L_DEC, HP)
    # contract the hidden dim of both operands (no transposed copy of the embedding table)
    logits = jax.lax.dot_general(dh, emb_ref[...],
                                 (((1,), (1,)), ((), ())),
                                 preferred_element_type=jnp.float32)  # (L_DEC, VOCAB) — lane-dense

    # ---- 5) CrossEntropyLoss(ignore_index=0) over decoder_output_Y = Y[:, 1:] ----
    lab = lab_ref[0]                                                  # (L_DEC, 1) int32
    m = jnp.max(logits, axis=-1, keepdims=True)
    lse = jnp.log(jnp.sum(jnp.exp(logits - m), axis=-1, keepdims=True)) + m
    onehot = jax.lax.broadcasted_iota(jnp.int32, logits.shape, 1) == lab
    picked = jnp.sum(jnp.where(onehot, logits, 0.0), axis=-1, keepdims=True)
    valid = (lab != 0).astype(jnp.float32)                            # ignore_index=0
    nll_acc[...] += (lse - picked) * valid                            # per-row partials, no XLU collapse here
    cnt_acc[...] += valid

    @pl.when(b == pl.num_programs(0) - 1)
    def _():
        # Divide-by-zero (all labels ignored) yields NaN, matching PyTorch's behavior.
        loss_ref[...] = (jnp.sum(nll_acc[...], keepdims=True)
                         / jnp.sum(cnt_acc[...], keepdims=True))


# ----------------------------------------------------------------------------------
# Parameters (natural sizes) and one-time lane-padding to 128
# ----------------------------------------------------------------------------------
def init_params(key):
    ks = jax.random.split(key, 8)
    s = 0.02
    return dict(
        word_emb=jax.random.normal(ks[0], (VOCAB, HIDDEN), jnp.float32) * s,
        pos_emb=jax.random.normal(ks[1], (MAX_POS, HIDDEN), jnp.float32) * s,
        vis_ln_g=jnp.ones((VIDEO_DIM,), jnp.float32),
        vis_ln_b=jnp.zeros((VIDEO_DIM,), jnp.float32),
        vis_W=jax.random.normal(ks[2], (VIDEO_DIM, HIDDEN), jnp.float32) * s,
        vis_b=jnp.zeros((HIDDEN,), jnp.float32),
        kg_W=jax.random.normal(ks[3], (HIDDEN, HIDDEN), jnp.float32) * s,
        kg_b=jnp.zeros((HIDDEN,), jnp.float32),
        type_emb=jax.random.normal(ks[4], (5, HIDDEN), jnp.float32) * s,
        loc_emb=jax.random.normal(ks[5], (16, HIDDEN), jnp.float32) * s,
        cross_ln_g=jnp.ones((HIDDEN,), jnp.float32),
        cross_ln_b=jnp.zeros((HIDDEN,), jnp.float32),
        cross_W=jax.random.normal(ks[6], (HIDDEN, HIDDEN), jnp.float32) * s,
        cross_b=jnp.zeros((HIDDEN,), jnp.float32),
    )


def _pad_last(a, to):
    p = to - a.shape[-1]
    return a if p == 0 else jnp.pad(a, [(0, 0)] * (a.ndim - 1) + [(0, p)])


def prepare_params(p):
    """Zero-pad every feature dim to HP=128 lanes (exactly preserves the un-padded math)."""
    return dict(
        word_emb=_pad_last(p["word_emb"], HP),                         # (VOCAB, HP)
        pos_emb=_pad_last(p["pos_emb"], HP),                           # (MAX_POS, HP)
        type_emb=_pad_last(p["type_emb"], HP),
        loc_emb=_pad_last(p["loc_emb"], HP),
        vis_ln_g=_pad_last(p["vis_ln_g"], HP).reshape(1, HP),
        vis_ln_b=_pad_last(p["vis_ln_b"], HP).reshape(1, HP),
        vis_W=jnp.pad(p["vis_W"], ((0, HP - VIDEO_DIM), (0, HP - HIDDEN))),
        vis_b=_pad_last(p["vis_b"], HP).reshape(1, HP),
        kg_W=jnp.pad(p["kg_W"], ((0, HP - HIDDEN), (0, HP - HIDDEN))),
        kg_b=_pad_last(p["kg_b"], HP).reshape(1, HP),
        cross_ln_g=_pad_last(p["cross_ln_g"], HP).reshape(1, HP),
        cross_ln_b=_pad_last(p["cross_ln_b"], HP).reshape(1, HP),
        cross_W=jnp.pad(p["cross_W"], ((0, HP - HIDDEN), (0, HP - HIDDEN))),
        cross_b=_pad_last(p["cross_b"], HP).reshape(1, HP),
    )


# ----------------------------------------------------------------------------------
# KLVCG forward (finetune branch: decoder CE loss, ignore_index=0)
# ----------------------------------------------------------------------------------
@jax.jit
def klvcg_forward(pp, I, K_token_ids, D_token_ids, Y, loc_time):
    B = I.shape[0]
    we = pp["word_emb"]

    # Lane-padded video features for the fused kernel (pad lanes zero).
    I_pad = _pad_last(I, HP)                                                  # (B, TV, HP)

    # TODO(synk): BertModel is not defined in the provided source; mean-pooled word embeddings stand in for time_cls.
    time_cls = jnp.mean(jnp.take(we, D_token_ids, axis=0), axis=2)            # (B, WD, HP)
    # TODO(synk): KGModel token encoder is not defined; pooled KG embeddings, fused with the query in-kernel.
    kg_pool = jnp.mean(jnp.take(we, K_token_ids, axis=0), axis=2)             # (B, WD, HP)

    # Exact KLVCG.forward type-id / loc_time plumbing (gathers stay in XLA; compute is fused).
    cross_type = jnp.concatenate(
        [jnp.zeros((B, 1), jnp.int32),
         jnp.ones((B, TV), jnp.int32),
         2 * jnp.ones((B, WD), jnp.int32),
         3 * jnp.ones((B, WD), jnp.int32)], axis=1)                           # (B, S_CROSS)
    loc_rep = jnp.tile(loc_time, (1, 6 * TIME_RANGE + 2))                     # (B, S_CROSS)
    typeloc = (jnp.take(pp["type_emb"], cross_type, axis=0)
               + jnp.take(pp["loc_emb"], loc_rep, axis=0))                    # (B, S_CROSS, HP)

    # Decoder token/position embeddings for Y[:, :-1]; targets Y[:, 1:].
    dec_in = Y[:, :-1]
    dec_h = jnp.take(we, dec_in, axis=0) + pp["pos_emb"][None, :L_DEC, :]     # (B, L_DEC, HP)
    labels = Y[:, 1:].astype(jnp.int32).reshape(B, L_DEC, 1)

    spec_b = lambda shape: pl.BlockSpec(shape, lambda b: (b, 0, 0))           # per-batch blocks
    spec_w = lambda shape: pl.BlockSpec(shape, lambda b: (0, 0))              # resident weights

    out = pl.pallas_call(
        _klvcg_fused_kernel,
        out_shape=jax.ShapeDtypeStruct((1, 1), jnp.float32),
        grid=(B,),
        in_specs=[
            spec_b((1, TV, HP)),
            spec_b((1, WD, HP)),
            spec_b((1, WD, HP)),
            spec_b((1, S_CROSS, HP)),
            spec_b((1, L_DEC, HP)),
            spec_b((1, L_DEC, 1)),
            spec_w((1, HP)), spec_w((1, HP)), spec_w((HP, HP)), spec_w((1, HP)),
            spec_w((HP, HP)), spec_w((1, HP)),
            spec_w((1, HP)), spec_w((1, HP)), spec_w((HP, HP)), spec_w((1, HP)),
            spec_w((VOCAB, HP)),
        ],
        out_specs=pl.BlockSpec((1, 1), lambda b: (0, 0)),
        scratch_shapes=[
            pltpu.VMEM((S_CROSS, HP), jnp.float32),   # cross_emb staging (VMEM-resident)
            pltpu.VMEM((L_DEC, 1), jnp.float32),      # CE nll partials
            pltpu.VMEM((L_DEC, 1), jnp.float32),      # CE valid-count partials
        ],
        compiler_params=pltpu.CompilerParams(dimension_semantics=("arbitrary",)),
    )(I_pad, time_cls, kg_pool, typeloc, dec_h, labels,
      pp["vis_ln_g"], pp["vis_ln_b"], pp["vis_W"], pp["vis_b"],
      pp["kg_W"], pp["kg_b"],
      pp["cross_ln_g"], pp["cross_ln_b"], pp["cross_W"], pp["cross_b"],
      we)
    return out[0, 0]


# ----------------------------------------------------------------------------------
if __name__ == "__main__":
    key = jax.random.PRNGKey(0)
    pkey, k1, k2, k3, k4, k5 = jax.random.split(key, 6)

    params = init_params(pkey)
    pparams = prepare_params(params)      # one-time lane padding (outside the jitted forward)

    B = 2
    Ltok = 6                              # tokens per danmaku / kg window

    I = jax.random.normal(k1, (B, TV, VIDEO_DIM), jnp.float32)
    D_token_ids = jax.random.randint(k2, (B, WD, Ltok), 1, VOCAB, jnp.int32)
    K_token_ids = jax.random.randint(k3, (B, WD, Ltok), 1, VOCAB, jnp.int32)
    Y = jax.random.randint(k4, (B, MAX_OUT_LEN), 0, VOCAB, jnp.int32)
    Y = Y.at[:, 0].set(1)                 # BOS, ensure some valid (nonzero) targets
    Y = Y.at[:, 1].set(5)
    loc_time = jax.random.randint(k5, (B, 1), 0, 16, jnp.int32)

    loss = klvcg_forward(pparams, I, K_token_ids, D_token_ids, Y, loc_time)
    loss = jax.block_until_ready(loss)
    assert jnp.isfinite(loss), f"loss not finite: {loss}"
    print("KERNEL_OK")
</pallas_src>

<mosaic_0001>
module attributes {stable_mosaic.version = 11 : i64} {
  func.func @_klvcg_fused_kernel(%arg0: i32, %arg1: memref<1x5x128xf32, #tpu.memory_space<vmem>>, %arg2: memref<1x4x128xf32, #tpu.memory_space<vmem>>, %arg3: memref<1x4x128xf32, #tpu.memory_space<vmem>>, %arg4: memref<1x14x128xf32, #tpu.memory_space<vmem>>, %arg5: memref<1x8x128xf32, #tpu.memory_space<vmem>>, %arg6: memref<1x8x1xi32, #tpu.memory_space<vmem>>, %arg7: memref<1x128xf32, #tpu.memory_space<vmem>>, %arg8: memref<1x128xf32, #tpu.memory_space<vmem>>, %arg9: memref<128x128xf32, #tpu.memory_space<vmem>>, %arg10: memref<1x128xf32, #tpu.memory_space<vmem>>, %arg11: memref<128x128xf32, #tpu.memory_space<vmem>>, %arg12: memref<1x128xf32, #tpu.memory_space<vmem>>, %arg13: memref<1x128xf32, #tpu.memory_space<vmem>>, %arg14: memref<1x128xf32, #tpu.memory_space<vmem>>, %arg15: memref<128x128xf32, #tpu.memory_space<vmem>>, %arg16: memref<1x128xf32, #tpu.memory_space<vmem>>, %arg17: memref<128x128xf32, #tpu.memory_space<vmem>>, %arg18: memref<1x1xf32, #tpu.memory_space<vmem>>, %arg19: memref<14x128xf32, #tpu.memory_space<vmem>>, %arg20: memref<8x1xf32, #tpu.memory_space<vmem>>, %arg21: memref<8x1xf32, #tpu.memory_space<vmem>>) attributes {dimension_semantics = [#tpu.dimension_semantics<arbitrary>], iteration_bounds = array<i64: 2>, scalar_prefetch = 0 : i64, scratch_operands = 3 : i64, tpu.core_type = #tpu.core_type<tc>, window_params = [{transform_indices = @transform_0, window_bounds = array<i64: 1, 5, 128>}, {transform_indices = @transform_1, window_bounds = array<i64: 1, 4, 128>}, {transform_indices = @transform_2, window_bounds = array<i64: 1, 4, 128>}, {transform_indices = @transform_3, window_bounds = array<i64: 1, 14, 128>}, {transform_indices = @transform_4, window_bounds = array<i64: 1, 8, 128>}, {transform_indices = @transform_5, window_bounds = array<i64: 1, 8, 1>}, {pipeline_mode = #tpu.pipeline_mode<synchronous>, transform_indices = @transform_6, window_bounds = array<i64: 1, 128>}, {pipeline_mode = #tpu.pipeline_mode<synchronous>, transform_indices = @transform_7, window_bounds = array<i64: 1, 128>}, {pipeline_mode = #tpu.pipeline_mode<synchronous>, transform_indices = @transform_8, window_bounds = array<i64: 128, 128>}, {pipeline_mode = #tpu.pipeline_mode<synchronous>, transform_indices = @transform_9, window_bounds = array<i64: 1, 128>}, {pipeline_mode = #tpu.pipeline_mode<synchronous>, transform_indices = @transform_10, window_bounds = array<i64: 128, 128>}, {pipeline_mode = #tpu.pipeline_mode<synchronous>, transform_indices = @transform_11, window_bounds = array<i64: 1, 128>}, {pipeline_mode = #tpu.pipeline_mode<synchronous>, transform_indices = @transform_12, window_bounds = array<i64: 1, 128>}, {pipeline_mode = #tpu.pipeline_mode<synchronous>, transform_indices = @transform_13, window_bounds = array<i64: 1, 128>}, {pipeline_mode = #tpu.pipeline_mode<synchronous>, transform_indices = @transform_14, window_bounds = array<i64: 128, 128>}, {pipeline_mode = #tpu.pipeline_mode<synchronous>, transform_indices = @transform_15, window_bounds = array<i64: 1, 128>}, {pipeline_mode = #tpu.pipeline_mode<synchronous>, transform_indices = @transform_16, window_bounds = array<i64: 128, 128>}, {pipeline_mode = #tpu.pipeline_mode<synchronous>, transform_indices = @transform_17, window_bounds = array<i64: 1, 1>}]} {
    %c0_i32 = arith.constant 0 : i32
    %0 = arith.cmpi eq, %arg0, %c0_i32 : i32
    %1 = arith.extui %0 : i1 to i32
    %c0_i32_0 = arith.constant 0 : i32
    %2 = arith.cmpi ne, %1, %c0_i32_0 : i32
    scf.if %2 {
      %cst_82 = arith.constant 0.000000e+00 : f32
      %138 = vector.broadcast %cst_82 : f32 to vector<8x1xf32>
      %c0_83 = arith.constant 0 : index
      %c0_84 = arith.constant 0 : index
      %139 = vector.load %arg20[%c0_83, %c0_84] : memref<8x1xf32, #tpu.memory_space<vmem>>, vector<8x1xf32>
      tpu.vector_store %arg20[%c0_83, %c0_84], %138 {strides = array<i32>} : memref<8x1xf32, #tpu.memory_space<vmem>>, vector<8x1xf32>,
      %cst_85 = arith.constant 0.000000e+00 : f32
      %140 = vector.broadcast %cst_85 : f32 to vector<8x1xf32>
      %c0_86 = arith.constant 0 : index
      %c0_87 = arith.constant 0 : index
      %141 = vector.load %arg21[%c0_86, %c0_87] : memref<8x1xf32, #tpu.memory_space<vmem>>, vector<8x1xf32>
      tpu.vector_store %arg21[%c0_86, %c0_87], %140 {strides = array<i32>} : memref<8x1xf32, #tpu.memory_space<vmem>>, vector<8x1xf32>,
    } else {
    }
    %c0 = arith.constant 0 : index
    %c0_1 = arith.constant 0 : index
    %c0_2 = arith.constant 0 : index
    %3 = vector.load %arg1[%c0, %c0_1, %c0_2] : memref<1x5x128xf32, #tpu.memory_space<vmem>>, vector<1x5x128xf32>
    %4 = vector.shape_cast %3 : vector<1x5x128xf32> to vector<5x128xf32>
    %cst = arith.constant dense<0.000000e+00> : vector<5xf32>
    %5 = vector.multi_reduction <add>, %4, %cst [1] : vector<5x128xf32> to vector<5xf32>
    %6 = vector.shape_cast %5 : vector<5xf32> to vector<5x1xf32>
    %cst_3 = arith.constant 0.0416666679 : f32
    %7 = vector.broadcast %cst_3 : f32 to vector<5x1xf32>
    %8 = arith.mulf %6, %7 : vector<5x1xf32>
    %9 = arith.mulf %4, %4 : vector<5x128xf32>
    %cst_4 = arith.constant dense<0.000000e+00> : vector<5xf32>
    %10 = vector.multi_reduction <add>, %9, %cst_4 [1] : vector<5x128xf32> to vector<5xf32>
    %11 = vector.shape_cast %10 : vector<5xf32> to vector<5x1xf32>
    %cst_5 = arith.constant 0.0416666679 : f32
    %12 = vector.broadcast %cst_5 : f32 to vector<5x1xf32>
    %13 = arith.mulf %11, %12 : vector<5x1xf32>
    %14 = arith.mulf %8, %8 : vector<5x1xf32>
    %15 = arith.subf %13, %14 : vector<5x1xf32>
    %cst_6 = arith.constant 0.000000e+00 : f32
    %16 = vector.broadcast %cst_6 : f32 to vector<5x1xf32>
    %17 = arith.maximumf %15, %16 : vector<5x1xf32>
    %18 = vector.broadcast %8 : vector<5x1xf32> to vector<5x128xf32>
    %19 = arith.subf %4, %18 : vector<5x128xf32>
    %cst_7 = arith.constant 9.99999996E-13 : f32
    %20 = vector.broadcast %cst_7 : f32 to vector<5x1xf32>
    %21 = arith.addf %17, %20 : vector<5x1xf32>
    %22 = math.rsqrt %21 : vector<5x1xf32>
    %23 = vector.broadcast %22 : vector<5x1xf32> to vector<5x128xf32>
    %24 = arith.mulf %19, %23 : vector<5x128xf32>
    %c0_8 = arith.constant 0 : index
    %c0_9 = arith.constant 0 : index
    %25 = vector.load %arg7[%c0_8, %c0_9] : memref<1x128xf32, #tpu.memory_space<vmem>>, vector<1x128xf32>
    %26 = vector.broadcast %25 : vector<1x128xf32> to vector<5x128xf32>
    %27 = arith.mulf %24, %26 : vector<5x128xf32>
    %c0_10 = arith.constant 0 : index
    %c0_11 = arith.constant 0 : index
    %28 = vector.load %arg8[%c0_10, %c0_11] : memref<1x128xf32, #tpu.memory_space<vmem>>, vector<1x128xf32>
    %29 = vector.broadcast %28 : vector<1x128xf32> to vector<5x128xf32>
    %30 = arith.addf %27, %29 : vector<5x128xf32>
    %c0_12 = arith.constant 0 : index
    %c0_13 = arith.constant 0 : index
    %31 = vector.load %arg9[%c0_12, %c0_13] : memref<128x128xf32, #tpu.memory_space<vmem>>, vector<128x128xf32>
    %cst_14 = arith.constant dense<0.000000e+00> : vector<5x128xf32>
    %32 = tpu.matmul %30, %31, %cst_14 {dimension_numbers = #tpu.dot_dimension_numbers<[1], [0], [0], [1], [0, 0, 1, 1], [], []>} : vector<5x128xf32>, vector<128x128xf32>, vector<5x128xf32> -> vector<5x128xf32>
    %c0_15 = arith.constant 0 : index
    %c0_16 = arith.constant 0 : index
    %33 = vector.load %arg10[%c0_15, %c0_16] : memref<1x128xf32, #tpu.memory_space<vmem>>, vector<1x128xf32>
    %34 = vector.broadcast %33 : vector<1x128xf32> to vector<5x128xf32>
    %35 = arith.addf %32, %34 : vector<5x128xf32>
    %c0_17 = arith.constant 0 : index
    %c0_18 = arith.constant 0 : index
    %c0_19 = arith.constant 0 : index
    %36 = vector.load %arg2[%c0_17, %c0_18, %c0_19] : memref<1x4x128xf32, #tpu.memory_space<vmem>>, vector<1x4x128xf32>
    %37 = vector.shape_cast %36 : vector<1x4x128xf32> to vector<4x128xf32>
    %c0_20 = arith.constant 0 : index
    %c0_21 = arith.constant 0 : index
    %c0_22 = arith.constant 0 : index
    %38 = vector.load %arg3[%c0_20, %c0_21, %c0_22] : memref<1x4x128xf32, #tpu.memory_space<vmem>>, vector<1x4x128xf32>
    %39 = vector.shape_cast %38 : vector<1x4x128xf32> to vector<4x128xf32>
    %40 = arith.addf %39, %37 : vector<4x128xf32>
    %c0_23 = arith.constant 0 : index
    %c0_24 = arith.constant 0 : index
    %41 = vector.load %arg11[%c0_23, %c0_24] : memref<128x128xf32, #tpu.memory_space<vmem>>, vector<128x128xf32>
    %cst_25 = arith.constant dense<0.000000e+00> : vector<4x128xf32>
    %42 = tpu.matmul %40, %41, %cst_25 {dimension_numbers = #tpu.dot_dimension_numbers<[1], [0], [0], [1], [0, 0, 1, 1], [], []>} : vector<4x128xf32>, vector<128x128xf32>, vector<4x128xf32> -> vector<4x128xf32>
    %c0_26 = arith.constant 0 : index
    %c0_27 = arith.constant 0 : index
    %43 = vector.load %arg12[%c0_26, %c0_27] : memref<1x128xf32, #tpu.memory_space<vmem>>, vector<1x128xf32>
    %44 = vector.broadcast %43 : vector<1x128xf32> to vector<4x128xf32>
    %45 = arith.addf %42, %44 : vector<4x128xf32>
    %cst_28 = arith.constant dense<0.000000e+00> : vector<128xf32>
    %46 = vector.multi_reduction <add>, %35, %cst_28 [0] : vector<5x128xf32> to vector<128xf32>
    %47 = vector.shape_cast %46 : vector<128xf32> to vector<1x128xf32>
    %cst_29 = arith.constant dense<0.000000e+00> : vector<128xf32>
    %48 = vector.multi_reduction <add>, %37, %cst_29 [0] : vector<4x128xf32> to vector<128xf32>
    %49 = vector.shape_cast %48 : vector<128xf32> to vector<1x128xf32>
    %50 = arith.addf %47, %49 : vector<1x128xf32>
    %cst_30 = arith.constant dense<0.000000e+00> : vector<128xf32>
    %51 = vector.multi_reduction <add>, %45, %cst_30 [0] : vector<4x128xf32> to vector<128xf32>
    %52 = vector.shape_cast %51 : vector<128xf32> to vector<1x128xf32>
    %53 = arith.addf %50, %52 : vector<1x128xf32>
    %cst_31 = arith.constant 0.0769230798 : f32
    %54 = vector.broadcast %cst_31 : f32 to vector<1x128xf32>
    %55 = arith.mulf %53, %54 : vector<1x128xf32>
    %c0_32 = arith.constant 0 : index
    %c0_33 = arith.constant 0 : index
    %56 = vector.load %arg19[%c0_32, %c0_33] : memref<14x128xf32, #tpu.memory_space<vmem>>, vector<1x128xf32>
    tpu.vector_store %arg19[%c0_32, %c0_33], %55 {strides = array<i32>} : memref<14x128xf32, #tpu.memory_space<vmem>>, vector<1x128xf32>,
    %c1 = arith.constant 1 : index
    %c0_34 = arith.constant 0 : index
    %57 = vector.load %arg19[%c1, %c0_34] : memref<14x128xf32, #tpu.memory_space<vmem>>, vector<5x128xf32>
    tpu.vector_store %arg19[%c1, %c0_34], %35 {strides = array<i32>} : memref<14x128xf32, #tpu.memory_space<vmem>>, vector<5x128xf32>,
    %c6 = arith.constant 6 : index
    %c0_35 = arith.constant 0 : index
    %58 = vector.load %arg19[%c6, %c0_35] : memref<14x128xf32, #tpu.memory_space<vmem>>, vector<4x128xf32>
    tpu.vector_store %arg19[%c6, %c0_35], %37 {strides = array<i32>} : memref<14x128xf32, #tpu.memory_space<vmem>>, vector<4x128xf32>,
    %c10 = arith.constant 10 : index
    %c0_36 = arith.constant 0 : index
    %59 = vector.load %arg19[%c10, %c0_36] : memref<14x128xf32, #tpu.memory_space<vmem>>, vector<4x128xf32>
    tpu.vector_store %arg19[%c10, %c0_36], %45 {strides = array<i32>} : memref<14x128xf32, #tpu.memory_space<vmem>>, vector<4x128xf32>,
    %c0_37 = arith.constant 0 : index
    %c0_38 = arith.constant 0 : index
    %60 = vector.load %arg19[%c0_37, %c0_38] : memref<14x128xf32, #tpu.memory_space<vmem>>, vector<14x128xf32>
    %c0_39 = arith.constant 0 : index
    %c0_40 = arith.constant 0 : index
    %c0_41 = arith.constant 0 : index
    %61 = vector.load %arg4[%c0_39, %c0_40, %c0_41] : memref<1x14x128xf32, #tpu.memory_space<vmem>>, vector<1x14x128xf32>
    %62 = vector.shape_cast %61 : vector<1x14x128xf32> to vector<14x128xf32>
    %63 = arith.addf %60, %62 : vector<14x128xf32>
    %cst_42 = arith.constant dense<0.000000e+00> : vector<14xf32>
    %64 = vector.multi_reduction <add>, %63, %cst_42 [1] : vector<14x128xf32> to vector<14xf32>
    %65 = vector.shape_cast %64 : vector<14xf32> to vector<14x1xf32>
    %cst_43 = arith.constant 3.125000e-02 : f32
    %66 = vector.broadcast %cst_43 : f32 to vector<14x1xf32>
    %67 = arith.mulf %65, %66 : vector<14x1xf32>
    %68 = arith.mulf %63, %63 : vector<14x128xf32>
    %cst_44 = arith.constant dense<0.000000e+00> : vector<14xf32>
    %69 = vector.multi_reduction <add>, %68, %cst_44 [1] : vector<14x128xf32> to vector<14xf32>
    %70 = vector.shape_cast %69 : vector<14xf32> to vector<14x1xf32>
    %cst_45 = arith.constant 3.125000e-02 : f32
    %71 = vector.broadcast %cst_45 : f32 to vector<14x1xf32>
    %72 = arith.mulf %70, %71 : vector<14x1xf32>
    %73 = arith.mulf %67, %67 : vector<14x1xf32>
    %74 = arith.subf %72, %73 : vector<14x1xf32>
    %cst_46 = arith.constant 0.000000e+00 : f32
    %75 = vector.broadcast %cst_46 : f32 to vector<14x1xf32>
    %76 = arith.maximumf %74, %75 : vector<14x1xf32>
    %77 = vector.broadcast %67 : vector<14x1xf32> to vector<14x128xf32>
    %78 = arith.subf %63, %77 : vector<14x128xf32>
    %cst_47 = arith.constant 9.99999996E-13 : f32
    %79 = vector.broadcast %cst_47 : f32 to vector<14x1xf32>
    %80 = arith.addf %76, %79 : vector<14x1xf32>
    %81 = math.rsqrt %80 : vector<14x1xf32>
    %82 = vector.broadcast %81 : vector<14x1xf32> to vector<14x128xf32>
    %83 = arith.mulf %78, %82 : vector<14x128xf32>
    %c0_48 = arith.constant 0 : index
    %c0_49 = arith.constant 0 : index
    %84 = vector.load %arg13[%c0_48, %c0_49] : memref<1x128xf32, #tpu.memory_space<vmem>>, vector<1x128xf32>
    %85 = vector.broadcast %84 : vector<1x128xf32> to vector<14x128xf32>
    %86 = arith.mulf %83, %85 : vector<14x128xf32>
    %c0_50 = arith.constant 0 : index
    %c0_51 = arith.constant 0 : index
    %87 = vector.load %arg14[%c0_50, %c0_51] : memref<1x128xf32, #tpu.memory_space<vmem>>, vector<1x128xf32>
    %88 = vector.broadcast %87 : vector<1x128xf32> to vector<14x128xf32>
    %89 = arith.addf %86, %88 : vector<14x128xf32>
    %c0_52 = arith.constant 0 : index
    %c0_53 = arith.constant 0 : index
    %90 = vector.load %arg15[%c0_52, %c0_53] : memref<128x128xf32, #tpu.memory_space<vmem>>, vector<128x128xf32>
    %cst_54 = arith.constant dense<0.000000e+00> : vector<14x128xf32>
    %91 = tpu.matmul %89, %90, %cst_54 {dimension_numbers = #tpu.dot_dimension_numbers<[1], [0], [0], [1], [0, 0, 1, 1], [], []>} : vector<14x128xf32>, vector<128x128xf32>, vector<14x128xf32> -> vector<14x128xf32>
    %c0_55 = arith.constant 0 : index
    %c0_56 = arith.constant 0 : index
    %92 = vector.load %arg16[%c0_55, %c0_56] : memref<1x128xf32, #tpu.memory_space<vmem>>, vector<1x128xf32>
    %93 = vector.broadcast %92 : vector<1x128xf32> to vector<14x128xf32>
    %94 = arith.addf %91, %93 : vector<14x128xf32>
    %cst_57 = arith.constant dense<0.000000e+00> : vector<128xf32>
    %95 = vector.multi_reduction <add>, %94, %cst_57 [0] : vector<14x128xf32> to vector<128xf32>
    %96 = vector.shape_cast %95 : vector<128xf32> to vector<1x128xf32>
    %cst_58 = arith.constant 1.400000e+01 : f32
    %97 = vector.broadcast %cst_58 : f32 to vector<1x128xf32>
    %98 = arith.divf %96, %97 : vector<1x128xf32>
    %c0_59 = arith.constant 0 : index
    %c0_60 = arith.constant 0 : index
    %c0_61 = arith.constant 0 : index
    %99 = vector.load %arg5[%c0_59, %c0_60, %c0_61] : memref<1x8x128xf32, #tpu.memory_space<vmem>>, vector<1x8x128xf32>
    %100 = vector.shape_cast %99 : vector<1x8x128xf32> to vector<8x128xf32>
    %101 = vector.broadcast %98 : vector<1x128xf32> to vector<8x128xf32>
    %102 = arith.addf %100, %101 : vector<8x128xf32>
    %c0_62 = arith.constant 0 : index
    %c0_63 = arith.constant 0 : index
    %103 = vector.load %arg17[%c0_62, %c0_63] : memref<128x128xf32, #tpu.memory_space<vmem>>, vector<128x128xf32>
    %cst_64 = arith.constant dense<0.000000e+00> : vector<8x128xf32>
    %104 = tpu.matmul %102, %103, %cst_64 {dimension_numbers = #tpu.dot_dimension_numbers<[1], [1], [0], [0], [0, 0, 1, 0], [], []>} : vector<8x128xf32>, vector<128x128xf32>, vector<8x128xf32> -> vector<8x128xf32>
    %c0_65 = arith.constant 0 : index
    %c0_66 = arith.constant 0 : index
    %c0_67 = arith.constant 0 : index
    %105 = vector.load %arg6[%c0_65, %c0_66, %c0_67] : memref<1x8x1xi32, #tpu.memory_space<vmem>>, vector<1x8x1xi32>
    %106 = vector.shape_cast %105 : vector<1x8x1xi32> to vector<8x1xi32>
    %cst_68 = arith.constant dense<0xFF800000> : vector<8xf32>
    %107 = vector.multi_reduction <maximumf>, %104, %cst_68 [1] : vector<8x128xf32> to vector<8xf32>
    %108 = vector.shape_cast %107 : vector<8xf32> to vector<8x1xf32>
    %109 = vector.broadcast %108 : vector<8x1xf32> to vector<8x128xf32>
    %110 = arith.subf %104, %109 : vector<8x128xf32>
    %111 = math.exp %110 : vector<8x128xf32>
    %cst_69 = arith.constant dense<0.000000e+00> : vector<8xf32>
    %112 = vector.multi_reduction <add>, %111, %cst_69 [1] : vector<8x128xf32> to vector<8xf32>
    %113 = vector.shape_cast %112 : vector<8xf32> to vector<8x1xf32>
    %114 = math.log %113 : vector<8x1xf32>
    %115 = arith.addf %114, %108 : vector<8x1xf32>
    %116 = tpu.iota {dimensions = array<i32: 1>} : vector<8x128xi32>
    %117 = vector.broadcast %106 : vector<8x1xi32> to vector<8x128xi32>
    %118 = arith.cmpi eq, %116, %117 : vector<8x128xi32>
    %cst_70 = arith.constant 0.000000e+00 : f32
    %119 = vector.broadcast %cst_70 : f32 to vector<8x128xf32>
    %120 = arith.select %118, %104, %119 : vector<8x128xi1>, vector<8x128xf32>
    %cst_71 = arith.constant dense<0.000000e+00> : vector<8xf32>
    %121 = vector.multi_reduction <add>, %120, %cst_71 [1] : vector<8x128xf32> to vector<8xf32>
    %122 = vector.shape_cast %121 : vector<8xf32> to vector<8x1xf32>
    %c0_i32_72 = arith.constant 0 : i32
    %123 = vector.broadcast %c0_i32_72 : i32 to vector<8x1xi32>
    %124 = arith.cmpi ne, %106, %123 : vector<8x1xi32>
    %125 = arith.extui %124 : vector<8x1xi1> to vector<8x1xi32>
    %126 = arith.sitofp %125 : vector<8x1xi32> to vector<8x1xf32>
    %c0_73 = arith.constant 0 : index
    %c0_74 = arith.constant 0 : index
    %127 = vector.load %arg20[%c0_73, %c0_74] : memref<8x1xf32, #tpu.memory_space<vmem>>, vector<8x1xf32>
    %128 = arith.subf %115, %122 : vector<8x1xf32>
    %129 = arith.mulf %128, %126 : vector<8x1xf32>
    %130 = arith.addf %127, %129 : vector<8x1xf32>
    %c0_75 = arith.constant 0 : index
    %c0_76 = arith.constant 0 : index
    %131 = vector.load %arg20[%c0_75, %c0_76] : memref<8x1xf32, #tpu.memory_space<vmem>>, vector<8x1xf32>
    tpu.vector_store %arg20[%c0_75, %c0_76], %130 {strides = array<i32>} : memref<8x1xf32, #tpu.memory_space<vmem>>, vector<8x1xf32>,
    %c0_77 = arith.constant 0 : index
    %c0_78 = arith.constant 0 : index
    %132 = vector.load %arg21[%c0_77, %c0_78] : memref<8x1xf32, #tpu.memory_space<vmem>>, vector<8x1xf32>
    %133 = arith.addf %132, %126 : vector<8x1xf32>
    %c0_79 = arith.constant 0 : index
    %c0_80 = arith.constant 0 : index
    %134 = vector.load %arg21[%c0_79, %c0_80] : memref<8x1xf32, #tpu.memory_space<vmem>>, vector<8x1xf32>
    tpu.vector_store %arg21[%c0_79, %c0_80], %133 {strides = array<i32>} : memref<8x1xf32, #tpu.memory_space<vmem>>, vector<8x1xf32>,
    %c1_i32 = arith.constant 1 : i32
    %135 = arith.cmpi eq, %arg0, %c1_i32 : i32
    %136 = arith.extui %135 : i1 to i32
    %c0_i32_81 = arith.constant 0 : i32
    %137 = arith.cmpi ne, %136, %c0_i32_81 : i32
    scf.if %137 {
      %c0_82 = arith.constant 0 : index
      %c0_83 = arith.constant 0 : index
      %138 = vector.load %arg20[%c0_82, %c0_83] : memref<8x1xf32, #tpu.memory_space<vmem>>, vector<8x1xf32>
      %139 = vector.shape_cast %138 : vector<8x1xf32> to vector<1x8x1xf32>
      %cst_84 = arith.constant dense<0.000000e+00> : vector<1xf32>
      %140 = vector.multi_reduction <add>, %139, %cst_84 [1, 2] : vector<1x8x1xf32> to vector<1xf32>
      %141 = vector.shape_cast %140 : vector<1xf32> to vector<1x1x1xf32>
      %142 = vector.extract %141[0, 0, 0] : f32 from vector<1x1x1xf32>
      %143 = vector.broadcast %142 : f32 to vector<1x1xf32>
      %c0_85 = arith.constant 0 : index
      %c0_86 = arith.constant 0 : index
      %144 = vector.load %arg21[%c0_85, %c0_86] : memref<8x1xf32, #tpu.memory_space<vmem>>, vector<8x1xf32>
      %145 = vector.shape_cast %144 : vector<8x1xf32> to vector<1x8x1xf32>
      %cst_87 = arith.constant dense<0.000000e+00> : vector<1xf32>
      %146 = vector.multi_reduction <add>, %145, %cst_87 [1, 2] : vector<1x8x1xf32> to vector<1xf32>
      %147 = vector.shape_cast %146 : vector<1xf32> to vector<1x1x1xf32>
      %148 = vector.extract %147[0, 0, 0] : f32 from vector<1x1x1xf32>
      %149 = vector.broadcast %148 : f32 to vector<1x1xf32>
      %150 = arith.divf %143, %149 : vector<1x1xf32>
      %c0_88 = arith.constant 0 : index
      %c0_89 = arith.constant 0 : index
      %151 = vector.load %arg18[%c0_88, %c0_89] : memref<1x1xf32, #tpu.memory_space<vmem>>, vector<1x1xf32>
      tpu.vector_store %arg18[%c0_88, %c0_89], %150 {strides = array<i32>} : memref<1x1xf32, #tpu.memory_space<vmem>>, vector<1x1xf32>,
    } else {
    }
    return
  }
  func.func @transform_0(%arg0: i32) -> (i32, i32, i32) {
    %c0_i32 = arith.constant 0 : i32
    %c0_i32_0 = arith.constant 0 : i32
    %c0_i32_1 = arith.constant 0 : i32
    return %arg0, %c0_i32, %c0_i32_0 : i32, i32, i32
  }
  func.func @transform_1(%arg0: i32) -> (i32, i32, i32) {
    %c0_i32 = arith.constant 0 : i32
    %c0_i32_0 = arith.constant 0 : i32
    %c0_i32_1 = arith.constant 0 : i32
    return %arg0, %c0_i32, %c0_i32_0 : i32, i32, i32
  }
  func.func @transform_2(%arg0: i32) -> (i32, i32, i32) {
    %c0_i32 = arith.constant 0 : i32
    %c0_i32_0 = arith.constant 0 : i32
    %c0_i32_1 = arith.constant 0 : i32
    return %arg0, %c0_i32, %c0_i32_0 : i32, i32, i32
  }
  func.func @transform_3(%arg0: i32) -> (i32, i32, i32) {
    %c0_i32 = arith.constant 0 : i32
    %c0_i32_0 = arith.constant 0 : i32
    %c0_i32_1 = arith.constant 0 : i32
    return %arg0, %c0_i32, %c0_i32_0 : i32, i32, i32
  }
  func.func @transform_4(%arg0: i32) -> (i32, i32, i32) {
    %c0_i32 = arith.constant 0 : i32
    %c0_i32_0 = arith.constant 0 : i32
    %c0_i32_1 = arith.constant 0 : i32
    return %arg0, %c0_i32, %c0_i32_0 : i32, i32, i32
  }
  func.func @transform_5(%arg0: i32) -> (i32, i32, i32) {
    %c0_i32 = arith.constant 0 : i32
    %c0_i32_0 = arith.constant 0 : i32
    %c0_i32_1 = arith.constant 0 : i32
    return %arg0, %c0_i32, %c0_i32_0 : i32, i32, i32
  }
  func.func @transform_6(%arg0: i32) -> (i32, i32) {
    %c0_i32 = arith.constant 0 : i32
    %c0_i32_0 = arith.constant 0 : i32
    %c0_i32_1 = arith.constant 0 : i32
    return %c0_i32, %c0_i32_0 : i32, i32
  }
  func.func @transform_7(%arg0: i32) -> (i32, i32) {
    %c0_i32 = arith.constant 0 : i32
    %c0_i32_0 = arith.constant 0 : i32
    %c0_i32_1 = arith.constant 0 : i32
    return %c0_i32, %c0_i32_0 : i32, i32
  }
  func.func @transform_8(%arg0: i32) -> (i32, i32) {
    %c0_i32 = arith.constant 0 : i32
    %c0_i32_0 = arith.constant 0 : i32
    %c0_i32_1 = arith.constant 0 : i32
    return %c0_i32, %c0_i32_0 : i32, i32
  }
  func.func @transform_9(%arg0: i32) -> (i32, i32) {
    %c0_i32 = arith.constant 0 : i32
    %c0_i32_0 = arith.constant 0 : i32
    %c0_i32_1 = arith.constant 0 : i32
    return %c0_i32, %c0_i32_0 : i32, i32
  }
  func.func @transform_10(%arg0: i32) -> (i32, i32) {
    %c0_i32 = arith.constant 0 : i32
    %c0_i32_0 = arith.constant 0 : i32
    %c0_i32_1 = arith.constant 0 : i32
    return %c0_i32, %c0_i32_0 : i32, i32
  }
  func.func @transform_11(%arg0: i32) -> (i32, i32) {
    %c0_i32 = arith.constant 0 : i32
    %c0_i32_0 = arith.constant 0 : i32
    %c0_i32_1 = arith.constant 0 : i32
    return %c0_i32, %c0_i32_0 : i32, i32
  }
  func.func @transform_12(%arg0: i32) -> (i32, i32) {
    %c0_i32 = arith.constant 0 : i32
    %c0_i32_0 = arith.constant 0 : i32
    %c0_i32_1 = arith.constant 0 : i32
    return %c0_i32, %c0_i32_0 : i32, i32
  }
  func.func @transform_13(%arg0: i32) -> (i32, i32) {
    %c0_i32 = arith.constant 0 : i32
    %c0_i32_0 = arith.constant 0 : i32
    %c0_i32_1 = arith.constant 0 : i32
    return %c0_i32, %c0_i32_0 : i32, i32
  }
  func.func @transform_14(%arg0: i32) -> (i32, i32) {
    %c0_i32 = arith.constant 0 : i32
    %c0_i32_0 = arith.constant 0 : i32
    %c0_i32_1 = arith.constant 0 : i32
    return %c0_i32, %c0_i32_0 : i32, i32
  }
  func.func @transform_15(%arg0: i32) -> (i32, i32) {
    %c0_i32 = arith.constant 0 : i32
    %c0_i32_0 = arith.constant 0 : i32
    %c0_i32_1 = arith.constant 0 : i32
    return %c0_i32, %c0_i32_0 : i32, i32
  }
  func.func @transform_16(%arg0: i32) -> (i32, i32) {
    %c0_i32 = arith.constant 0 : i32
    %c0_i32_0 = arith.constant 0 : i32
    %c0_i32_1 = arith.constant 0 : i32
    return %c0_i32, %c0_i32_0 : i32, i32
  }
  func.func @transform_17(%arg0: i32) -> (i32, i32) {
    %c0_i32 = arith.constant 0 : i32
    %c0_i32_0 = arith.constant 0 : i32
    %c0_i32_1 = arith.constant 0 : i32
    return %c0_i32, %c0_i32_0 : i32, i32
  }
}

</mosaic_0001>

<llo_original>
// kernel: klvcg_forward.1
$region0: #{klvcg_forward.1}
  #allocation0 [shape = 'u32[]', space=smem, size = 0x4, offset = 0x4, fixed_abs, tag = 'smem constant byte address 0x4 - core index']
  #allocation1 [shape = 'u32[144,128]{1,0:T(1,128)}', space=vmem, size = 0x12000, scoped, tag = 'internal scratch']
  #allocation2 [shape = 'f32[14,128]{1,0:T(8,128)}', space=vmem, size = 0x2000, scoped, tag = 'scratch operand']
  #allocation3 [shape = 'f32[8,1]{1,0:T(8,128)}', space=vmem, size = 0x1000, scoped, tag = 'scratch operand']
  #allocation4 [shape = 'f32[8,1]{1,0:T(8,128)}', space=vmem, size = 0x1000, scoped, tag = 'scratch operand']
  %s0 = inlined_call_operand.vmem [shape: f32[2,5,128], index: 0, kind: input, shape index: {}]
  %s1 = inlined_call_operand.vmem [shape: f32[2,4,128], index: 1, kind: input, shape index: {}]
  %s2 = inlined_call_operand.vmem [shape: f32[2,4,128], index: 2, kind: input, shape index: {}]
  %s3 = inlined_call_operand.vmem [shape: f32[2,14,128], index: 3, kind: input, shape index: {}]
  %s4 = inlined_call_operand.vmem [shape: f32[2,8,128], index: 4, kind: input, shape index: {}]
  %s5 = inlined_call_operand.vmem [shape: s32[2,8,1], index: 5, kind: input, shape index: {}]
  %s6 = inlined_call_operand.vmem [shape: f32[1,128], index: 6, kind: input, shape index: {}]
  %s7 = inlined_call_operand.vmem [shape: f32[1,128], index: 7, kind: input, shape index: {}]
  %s8 = inlined_call_operand.vmem [shape: f32[128,128], index: 8, kind: input, shape index: {}]
  %s9 = inlined_call_operand.vmem [shape: f32[1,128], index: 9, kind: input, shape index: {}]
  %s10 = inlined_call_operand.vmem [shape: f32[128,128], index: 10, kind: input, shape index: {}]
  %s11 = inlined_call_operand.vmem [shape: f32[1,128], index: 11, kind: input, shape index: {}]
  %s12 = inlined_call_operand.vmem [shape: f32[1,128], index: 12, kind: input, shape index: {}]
  %s13 = inlined_call_operand.vmem [shape: f32[1,128], index: 13, kind: input, shape index: {}]
  %s14 = inlined_call_operand.vmem [shape: f32[128,128], index: 14, kind: input, shape index: {}]
  %s15 = inlined_call_operand.vmem [shape: f32[1,128], index: 15, kind: input, shape index: {}]
  %s16 = inlined_call_operand.vmem [shape: f32[128,128], index: 16, kind: input, shape index: {}]
  %s17 = inlined_call_operand.hbm [shape: f32[1,1], index: 17, kind: output, shape index: {}]
  %s18 = sld [smem:[#allocation0]]
  $region109: #{klvcg_forward.1} parent=0
    _
  %s20 = ssub.s32 1, %s18
  %s21 = scalar_select 0, %s20, %s18
  $region1: #{klvcg_forward.1} parent=0
    #allocation5 [shape = 'u8[512]{0}', space=vmem, size = 0x400, scoped, tag = 'output window, operand 0, single buffered']
    #allocation6 [shape = 's32[2]{0}', space=sflag, size = 0x8, scoped, tag = 'scoped memory for klvcg_forward.1']
    %22 = vsyncpa [#allocation6], 0
    loop: start=0, step=1, limit=4
    $region2: #{klvcg_forward.1} parent=1 // loop_pre_header
      _
    $region3: #{klvcg_forward.1} parent=1 // loop_header
      %s24 = sphi 0, %s28
      %p25 = scmp.ge.s32.totalorder %s24, 4
      %s34 = sphi 0, %s36
      %s37 = sphi 0, %s34
      %s38 = sphi 0, %s37
      %s54 = sphi 0, %s38
      %s60 = sphi 0, %s62
      %s63 = sphi 0, %s60
      %s64 = sphi 0, %s63
      %s80 = sphi 0, %s64
      %s86 = sphi 0, %s88
      %s89 = sphi 0, %s86
      %s90 = sphi 0, %s89
      %s106 = sphi 0, %s90
      %s112 = sphi 0, %s114
      %s115 = sphi 0, %s112
      %s116 = sphi 0, %s115
      %s132 = sphi 0, %s116
      %s138 = sphi 0, %s140
      %s141 = sphi 0, %s138
      %s142 = sphi 0, %s141
      %s158 = sphi 0, %s142
      %s164 = sphi 0, %s166
      %s167 = sphi 0, %s164
      %s168 = sphi 0, %s167
      %s184 = sphi 0, %s168
      %s188 = sphi 0, %s188
      %s190 = sphi 0, %s188
      %s191 = sphi 0, %s190
      %s205 = sphi 0, %s191
      %s209 = sphi 0, %s209
      %s211 = sphi 0, %s209
      %s212 = sphi 0, %s211
      %s226 = sphi 0, %s212
      %s230 = sphi 0, %s230
      %s232 = sphi 0, %s230
      %s233 = sphi 0, %s232
      %s247 = sphi 0, %s233
      %s251 = sphi 0, %s251
      %s253 = sphi 0, %s251
      %s254 = sphi 0, %s253
      %s268 = sphi 0, %s254
      %s272 = sphi 0, %s272
      %s274 = sphi 0, %s272
      %s275 = sphi 0, %s274
      %s289 = sphi 0, %s275
      %s293 = sphi 0, %s293
      %s295 = sphi 0, %s293
      %s296 = sphi 0, %s295
      %s310 = sphi 0, %s296
      %s314 = sphi 0, %s314
      %s316 = sphi 0, %s314
      %s317 = sphi 0, %s316
      %s331 = sphi 0, %s317
      %s335 = sphi 0, %s335
      %s337 = sphi 0, %s335
      %s338 = sphi 0, %s337
      %s352 = sphi 0, %s338
      %s356 = sphi 0, %s356
      %s358 = sphi 0, %s356
      %s359 = sphi 0, %s358
      %s373 = sphi 0, %s359
      %s377 = sphi 0, %s377
      %s379 = sphi 0, %s377
      %s380 = sphi 0, %s379
      %s394 = sphi 0, %s380
      %s398 = sphi 0, %s398
      %s400 = sphi 0, %s398
      %s401 = sphi 0, %s400
      %s415 = sphi 0, %s401
      %s419 = sphi 0, %s419
      %s421 = sphi 0, %s419
      %s422 = sphi 0, %s421
      %s436 = sphi 0, %s422
    $region4: #{klvcg_forward.1} parent=1 // loop_header_branch
      %27 = sbr.rel (%p25) target = $region8
    $region5: #{klvcg_forward.1} parent=1 // loop_body
      %s29 = ssub.s32 %s24, 1
      %s30 = ssub.s32 %s24, 2
      %s31 = sadd.s32 %s24, 1
      %s32 = ssub.s32 %s24, %s31
      %p33 = scmp.eq.s32.totalorder %s32, 0
      %s35 = sadd.s32 %s34, 1
      %s36 = scalar_select %p33, %s34, %s35
      %p39 = pneg %p33
      %p40 = scmp.eq.s32.totalorder %s24, 1
      %p41 = por %p39, %p40
      %p42 = scmp.ne.s32.totalorder %s34, %s37
      %p43 = scmp.eq.s32.totalorder %s24, 0
      %p44 = por %p42, %p43
      %p45 = scmp.ne.s32.totalorder %s34, %s37
      %p46 = scmp.eq.s32.totalorder %s29, 1
      %p47 = por %p45, %p46
      %p48 = scmp.ne.s32.totalorder %s37, %s38
      %p49 = scmp.eq.s32.totalorder %s29, 0
      %p50 = por %p48, %p49
      %p51 = scmp.ne.s32.totalorder %s37, %s38
      %p52 = scmp.eq.s32.totalorder %s30, 1
      %p53 = por %p51, %p52
      %p55 = scmp.ne.s32.totalorder %s38, %s54
      %p56 = scmp.eq.s32.totalorder %s30, 0
      %p57 = por %p55, %p56
      %s58 = ssub.s32 %s24, %s31
      %p59 = scmp.eq.s32.totalorder %s58, 0
      %s61 = sadd.s32 %s60, 1
      %s62 = scalar_select %p59, %s60, %s61
      %p65 = pneg %p59
      %p66 = scmp.eq.s32.totalorder %s24, 1
      %p67 = por %p65, %p66
      %p68 = scmp.ne.s32.totalorder %s60, %s63
      %p69 = scmp.eq.s32.totalorder %s24, 0
      %p70 = por %p68, %p69
      %p71 = scmp.ne.s32.totalorder %s60, %s63
      %p72 = scmp.eq.s32.totalorder %s29, 1
      %p73 = por %p71, %p72
      %p74 = scmp.ne.s32.totalorder %s63, %s64
      %p75 = scmp.eq.s32.totalorder %s29, 0
      %p76 = por %p74, %p75
      %p77 = scmp.ne.s32.totalorder %s63, %s64
      %p78 = scmp.eq.s32.totalorder %s30, 1
      %p79 = por %p77, %p78
      %p81 = scmp.ne.s32.totalorder %s64, %s80
      %p82 = scmp.eq.s32.totalorder %s30, 0
      %p83 = por %p81, %p82
      %s84 = ssub.s32 %s24, %s31
      %p85 = scmp.eq.s32.totalorder %s84, 0
      %s87 = sadd.s32 %s86, 1
      %s88 = scalar_select %p85, %s86, %s87
      %p91 = pneg %p85
      %p92 = scmp.eq.s32.totalorder %s24, 1
      %p93 = por %p91, %p92
      %p94 = scmp.ne.s32.totalorder %s86, %s89
      %p95 = scmp.eq.s32.totalorder %s24, 0
      %p96 = por %p94, %p95
      %p97 = scmp.ne.s32.totalorder %s86, %s89
      %p98 = scmp.eq.s32.totalorder %s29, 1
      %p99 = por %p97, %p98
      %p100 = scmp.ne.s32.totalorder %s89, %s90
      %p101 = scmp.eq.s32.totalorder %s29, 0
      %p102 = por %p100, %p101
      %p103 = scmp.ne.s32.totalorder %s89, %s90
      %p104 = scmp.eq.s32.totalorder %s30, 1
      %p105 = por %p103, %p104
      %p107 = scmp.ne.s32.totalorder %s90, %s106
      %p108 = scmp.eq.s32.totalorder %s30, 0
      %p109 = por %p107, %p108
      %s110 = ssub.s32 %s24, %s31
      %p111 = scmp.eq.s32.totalorder %s110, 0
      %s113 = sadd.s32 %s112, 1
      %s114 = scalar_select %p111, %s112, %s113
      %p117 = pneg %p111
      %p118 = scmp.eq.s32.totalorder %s24, 1
      %p119 = por %p117, %p118
      %p120 = scmp.ne.s32.totalorder %s112, %s115
      %p121 = scmp.eq.s32.totalorder %s24, 0
      %p122 = por %p120, %p121
      %p123 = scmp.ne.s32.totalorder %s112, %s115
      %p124 = scmp.eq.s32.totalorder %s29, 1
      %p125 = por %p123, %p124
      %p126 = scmp.ne.s32.totalorder %s115, %s116
      %p127 = scmp.eq.s32.totalorder %s29, 0
      %p128 = por %p126, %p127
      %p129 = scmp.ne.s32.totalorder %s115, %s116
      %p130 = scmp.eq.s32.totalorder %s30, 1
      %p131 = por %p129, %p130
      %p133 = scmp.ne.s32.totalorder %s116, %s132
      %p134 = scmp.eq.s32.totalorder %s30, 0
      %p135 = por %p133, %p134
      %s136 = ssub.s32 %s24, %s31
      %p137 = scmp.eq.s32.totalorder %s136, 0
      %s139 = sadd.s32 %s138, 1
      %s140 = scalar_select %p137, %s138, %s139
      %p143 = pneg %p137
      %p144 = scmp.eq.s32.totalorder %s24, 1
      %p145 = por %p143, %p144
      %p146 = scmp.ne.s32.totalorder %s138, %s141
      %p147 = scmp.eq.s32.totalorder %s24, 0
      %p148 = por %p146, %p147
      %p149 = scmp.ne.s32.totalorder %s138, %s141
      %p150 = scmp.eq.s32.totalorder %s29, 1
      %p151 = por %p149, %p150
      %p152 = scmp.ne.s32.totalorder %s141, %s142
      %p153 = scmp.eq.s32.totalorder %s29, 0
      %p154 = por %p152, %p153
      %p155 = scmp.ne.s32.totalorder %s141, %s142
      %p156 = scmp.eq.s32.totalorder %s30, 1
      %p157 = por %p155, %p156
      %p159 = scmp.ne.s32.totalorder %s142, %s158
      %p160 = scmp.eq.s32.totalorder %s30, 0
      %p161 = por %p159, %p160
      %s162 = ssub.s32 %s24, %s31
      %p163 = scmp.eq.s32.totalorder %s162, 0
      %s165 = sadd.s32 %s164, 1
      %s166 = scalar_select %p163, %s164, %s165
      %p169 = pneg %p163
      %p170 = scmp.eq.s32.totalorder %s24, 1
      %p171 = por %p169, %p170
      %p172 = scmp.ne.s32.totalorder %s164, %s167
      %p173 = scmp.eq.s32.totalorder %s24, 0
      %p174 = por %p172, %p173
      %p175 = scmp.ne.s32.totalorder %s164, %s167
      %p176 = scmp.eq.s32.totalorder %s29, 1
      %p177 = por %p175, %p176
      %p178 = scmp.ne.s32.totalorder %s167, %s168
      %p179 = scmp.eq.s32.totalorder %s29, 0
      %p180 = por %p178, %p179
      %p181 = scmp.ne.s32.totalorder %s167, %s168
      %p182 = scmp.eq.s32.totalorder %s30, 1
      %p183 = por %p181, %p182
      %p185 = scmp.ne.s32.totalorder %s168, %s184
      %p186 = scmp.eq.s32.totalorder %s30, 0
      %p187 = por %p185, %p186
      %s189 = sadd.s32 %s188, 1
      %p192 = scmp.eq.s32.totalorder %s24, 1
      %p193 = scmp.ne.s32.totalorder %s188, %s190
      %p194 = scmp.eq.s32.totalorder %s24, 0
      %p195 = por %p193, %p194
      %p196 = scmp.ne.s32.totalorder %s188, %s190
      %p197 = scmp.eq.s32.totalorder %s29, 1
      %p198 = por %p196, %p197
      %p199 = scmp.ne.s32.totalorder %s190, %s191
      %p200 = scmp.eq.s32.totalorder %s29, 0
      %p201 = por %p199, %p200
      %p202 = scmp.ne.s32.totalorder %s190, %s191
      %p203 = scmp.eq.s32.totalorder %s30, 1
      %p204 = por %p202, %p203
      %p206 = scmp.ne.s32.totalorder %s191, %s205
      %p207 = scmp.eq.s32.totalorder %s30, 0
      %p208 = por %p206, %p207
      %s210 = sadd.s32 %s209, 1
      %p213 = scmp.eq.s32.totalorder %s24, 1
      %p214 = scmp.ne.s32.totalorder %s209, %s211
      %p215 = scmp.eq.s32.totalorder %s24, 0
      %p216 = por %p214, %p215
      %p217 = scmp.ne.s32.totalorder %s209, %s211
      %p218 = scmp.eq.s32.totalorder %s29, 1
      %p219 = por %p217, %p218
      %p220 = scmp.ne.s32.totalorder %s211, %s212
      %p221 = scmp.eq.s32.totalorder %s29, 0
      %p222 = por %p220, %p221
      %p223 = scmp.ne.s32.totalorder %s211, %s212
      %p224 = scmp.eq.s32.totalorder %s30, 1
      %p225 = por %p223, %p224
      %p227 = scmp.ne.s32.totalorder %s212, %s226
      %p228 = scmp.eq.s32.totalorder %s30, 0
      %p229 = por %p227, %p228
      %s231 = sadd.s32 %s230, 1
      %p234 = scmp.eq.s32.totalorder %s24, 1
      %p235 = scmp.ne.s32.totalorder %s230, %s232
      %p236 = scmp.eq.s32.totalorder %s24, 0
      %p237 = por %p235, %p236
      %p238 = scmp.ne.s32.totalorder %s230, %s232
      %p239 = scmp.eq.s32.totalorder %s29, 1
      %p240 = por %p238, %p239
      %p241 = scmp.ne.s32.totalorder %s232, %s233
      %p242 = scmp.eq.s32.totalorder %s29, 0
      %p243 = por %p241, %p242
      %p244 = scmp.ne.s32.totalorder %s232, %s233
      %p245 = scmp.eq.s32.totalorder %s30, 1
      %p246 = por %p244, %p245
      %p248 = scmp.ne.s32.totalorder %s233, %s247
      %p249 = scmp.eq.s32.totalorder %s30, 0
      %p250 = por %p248, %p249
      %s252 = sadd.s32 %s251, 1
      %p255 = scmp.eq.s32.totalorder %s24, 1
      %p256 = scmp.ne.s32.totalorder %s251, %s253
      %p257 = scmp.eq.s32.totalorder %s24, 0
      %p258 = por %p256, %p257
      %p259 = scmp.ne.s32.totalorder %s251, %s253
      %p260 = scmp.eq.s32.totalorder %s29, 1
      %p261 = por %p259, %p260
      %p262 = scmp.ne.s32.totalorder %s253, %s254
      %p263 = scmp.eq.s32.totalorder %s29, 0
      %p264 = por %p262, %p263
      %p265 = scmp.ne.s32.totalorder %s253, %s254
      %p266 = scmp.eq.s32.totalorder %s30, 1
      %p267 = por %p265, %p266
      %p269 = scmp.ne.s32.totalorder %s254, %s268
      %p270 = scmp.eq.s32.totalorder %s30, 0
      %p271 = por %p269, %p270
      %s273 = sadd.s32 %s272, 1
      %p276 = scmp.eq.s32.totalorder %s24, 1
      %p277 = scmp.ne.s32.totalorder %s272, %s274
      %p278 = scmp.eq.s32.totalorder %s24, 0
      %p279 = por %p277, %p278
      %p280 = scmp.ne.s32.totalorder %s272, %s274
      %p281 = scmp.eq.s32.totalorder %s29, 1
      %p282 = por %p280, %p281
      %p283 = scmp.ne.s32.totalorder %s274, %s275
      %p284 = scmp.eq.s32.totalorder %s29, 0
      %p285 = por %p283, %p284
      %p286 = scmp.ne.s32.totalorder %s274, %s275
      %p287 = scmp.eq.s32.totalorder %s30, 1
      %p288 = por %p286, %p287
      %p290 = scmp.ne.s32.totalorder %s275, %s289
      %p291 = scmp.eq.s32.totalorder %s30, 0
      %p292 = por %p290, %p291
      %s294 = sadd.s32 %s293, 1
      %p297 = scmp.eq.s32.totalorder %s24, 1
      %p298 = scmp.ne.s32.totalorder %s293, %s295
      %p299 = scmp.eq.s32.totalorder %s24, 0
      %p300 = por %p298, %p299
      %p301 = scmp.ne.s32.totalorder %s293, %s295
      %p302 = scmp.eq.s32.totalorder %s29, 1
      %p303 = por %p301, %p302
      %p304 = scmp.ne.s32.totalorder %s295, %s296
      %p305 = scmp.eq.s32.totalorder %s29, 0
      %p306 = por %p304, %p305
      %p307 = scmp.ne.s32.totalorder %s295, %s296
      %p308 = scmp.eq.s32.totalorder %s30, 1
      %p309 = por %p307, %p308
      %p311 = scmp.ne.s32.totalorder %s296, %s310
      %p312 = scmp.eq.s32.totalorder %s30, 0
      %p313 = por %p311, %p312
      %s315 = sadd.s32 %s314, 1
      %p318 = scmp.eq.s32.totalorder %s24, 1
      %p319 = scmp.ne.s32.totalorder %s314, %s316
      %p320 = scmp.eq.s32.totalorder %s24, 0
      %p321 = por %p319, %p320
      %p322 = scmp.ne.s32.totalorder %s314, %s316
      %p323 = scmp.eq.s32.totalorder %s29, 1
      %p324 = por %p322, %p323
      %p325 = scmp.ne.s32.totalorder %s316, %s317
      %p326 = scmp.eq.s32.totalorder %s29, 0
      %p327 = por %p325, %p326
      %p328 = scmp.ne.s32.totalorder %s316, %s317
      %p329 = scmp.eq.s32.totalorder %s30, 1
      %p330 = por %p328, %p329
      %p332 = scmp.ne.s32.totalorder %s317, %s331
      %p333 = scmp.eq.s32.totalorder %s30, 0
      %p334 = por %p332, %p333
      %s336 = sadd.s32 %s335, 1
      %p339 = scmp.eq.s32.totalorder %s24, 1
      %p340 = scmp.ne.s32.totalorder %s335, %s337
      %p341 = scmp.eq.s32.totalorder %s24, 0
      %p342 = por %p340, %p341
      %p343 = scmp.ne.s32.totalorder %s335, %s337
      %p344 = scmp.eq.s32.totalorder %s29, 1
      %p345 = por %p343, %p344
      %p346 = scmp.ne.s32.totalorder %s337, %s338
      %p347 = scmp.eq.s32.totalorder %s29, 0
      %p348 = por %p346, %p347
      %p349 = scmp.ne.s32.totalorder %s337, %s338
      %p350 = scmp.eq.s32.totalorder %s30, 1
      %p351 = por %p349, %p350
      %p353 = scmp.ne.s32.totalorder %s338, %s352
      %p354 = scmp.eq.s32.totalorder %s30, 0
      %p355 = por %p353, %p354
      %s357 = sadd.s32 %s356, 1
      %p360 = scmp.eq.s32.totalorder %s24, 1
      %p361 = scmp.ne.s32.totalorder %s356, %s358
      %p362 = scmp.eq.s32.totalorder %s24, 0
      %p363 = por %p361, %p362
      %p364 = scmp.ne.s32.totalorder %s356, %s358
      %p365 = scmp.eq.s32.totalorder %s29, 1
      %p366 = por %p364, %p365
      %p367 = scmp.ne.s32.totalorder %s358, %s359
      %p368 = scmp.eq.s32.totalorder %s29, 0
      %p369 = por %p367, %p368
      %p370 = scmp.ne.s32.totalorder %s358, %s359
      %p371 = scmp.eq.s32.totalorder %s30, 1
      %p372 = por %p370, %p371
      %p374 = scmp.ne.s32.totalorder %s359, %s373
      %p375 = scmp.eq.s32.totalorder %s30, 0
      %p376 = por %p374, %p375
      %s378 = sadd.s32 %s377, 1
      %p381 = scmp.eq.s32.totalorder %s24, 1
      %p382 = scmp.ne.s32.totalorder %s377, %s379
      %p383 = scmp.eq.s32.totalorder %s24, 0
      %p384 = por %p382, %p383
      %p385 = scmp.ne.s32.totalorder %s377, %s379
      %p386 = scmp.eq.s32.totalorder %s29, 1
      %p387 = por %p385, %p386
      %p388 = scmp.ne.s32.totalorder %s379, %s380
      %p389 = scmp.eq.s32.totalorder %s29, 0
      %p390 = por %p388, %p389
      %p391 = scmp.ne.s32.totalorder %s379, %s380
      %p392 = scmp.eq.s32.totalorder %s30, 1
      %p393 = por %p391, %p392
      %p395 = scmp.ne.s32.totalorder %s380, %s394
      %p396 = scmp.eq.s32.totalorder %s30, 0
      %p397 = por %p395, %p396
      %s399 = sadd.s32 %s398, 1
      %p402 = scmp.eq.s32.totalorder %s24, 1
      %p403 = scmp.ne.s32.totalorder %s398, %s400
      %p404 = scmp.eq.s32.totalorder %s24, 0
      %p405 = por %p403, %p404
      %p406 = scmp.ne.s32.totalorder %s398, %s400
      %p407 = scmp.eq.s32.totalorder %s29, 1
      %p408 = por %p406, %p407
      %p409 = scmp.ne.s32.totalorder %s400, %s401
      %p410 = scmp.eq.s32.totalorder %s29, 0
      %p411 = por %p409, %p410
      %p412 = scmp.ne.s32.totalorder %s400, %s401
      %p413 = scmp.eq.s32.totalorder %s30, 1
      %p414 = por %p412, %p413
      %p416 = scmp.ne.s32.totalorder %s401, %s415
      %p417 = scmp.eq.s32.totalorder %s30, 0
      %p418 = por %p416, %p417
      %s420 = sadd.s32 %s419, 1
      %p423 = scmp.eq.s32.totalorder %s24, 1
      %p424 = scmp.ne.s32.totalorder %s419, %s421
      %p425 = scmp.eq.s32.totalorder %s24, 0
      %p426 = por %p424, %p425
      %p427 = scmp.ne.s32.totalorder %s419, %s421
      %p428 = scmp.eq.s32.totalorder %s29, 1
      %p429 = por %p427, %p428
      %p430 = scmp.ne.s32.totalorder %s421, %s422
      %p431 = scmp.eq.s32.totalorder %s29, 0
      %p432 = por %p430, %p431
      %p433 = scmp.ne.s32.totalorder %s421, %s422
      %p434 = scmp.eq.s32.totalorder %s30, 1
      %p435 = por %p433, %p434
      %p437 = scmp.ne.s32.totalorder %s422, %s436
      %p438 = scmp.eq.s32.totalorder %s30, 0
      %p439 = por %p437, %p438
      %p440 = scmp.le.s32.totalorder 1, %s24
      %p441 = scmp.lt.s32.totalorder %s24, 3
      %p442 = pnand %p440, %p441
      %p443 = pneg %p442
      // Predicated region
      $region9: #{klvcg_forward.1} parent=5 // pred_check
        _
      $region10: #{klvcg_forward.1} parent=5 // pred_check_branch
        %445 = sbr.rel (%p442) target = $region12
      $region11: #{klvcg_forward.1} parent=5 // pred_region
        %s446 = ssub.s32 %s24, 1
        // Predicated region
        $region13: #{klvcg_forward.1} parent=11 // pred_check
          %p447 = pneg %p201
        $region14: #{klvcg_forward.1} parent=11 // pred_check_branch
          %449 = sbr.rel (%p447) target = $region16
        $region15: #{klvcg_forward.1} parent=11 // pred_region
          _
        $region16: #{klvcg_forward.1} parent=11 // pred_fallthru
          _
        // Predicated region
        $region17: #{klvcg_forward.1} parent=11 // pred_check
          %p450 = pneg %p222
        $region18: #{klvcg_forward.1} parent=11 // pred_check_branch
          %452 = sbr.rel (%p450) target = $region20
        $region19: #{klvcg_forward.1} parent=11 // pred_region
          _
        $region20: #{klvcg_forward.1} parent=11 // pred_fallthru
          _
        // Predicated region
        $region21: #{klvcg_forward.1} parent=11 // pred_check
          %p453 = pneg %p243
        $region22: #{klvcg_forward.1} parent=11 // pred_check_branch
          %455 = sbr.rel (%p453) target = $region24
        $region23: #{klvcg_forward.1} parent=11 // pred_region
          _
        $region24: #{klvcg_forward.1} parent=11 // pred_fallthru
          _
        // Predicated region
        $region25: #{klvcg_forward.1} parent=11 // pred_check
          %p456 = pneg %p264
        $region26: #{klvcg_forward.1} parent=11 // pred_check_branch
          %458 = sbr.rel (%p456) target = $region28
        $region27: #{klvcg_forward.1} parent=11 // pred_region
          _
        $region28: #{klvcg_forward.1} parent=11 // pred_fallthru
          _
        // Predicated region
        $region29: #{klvcg_forward.1} parent=11 // pred_check
          %p459 = pneg %p285
        $region30: #{klvcg_forward.1} parent=11 // pred_check_branch
          %461 = sbr.rel (%p459) target = $region32
        $region31: #{klvcg_forward.1} parent=11 // pred_region
          _
        $region32: #{klvcg_forward.1} parent=11 // pred_fallthru
          _
        // Predicated region
        $region33: #{klvcg_forward.1} parent=11 // pred_check
          %p462 = pneg %p306
        $region34: #{klvcg_forward.1} parent=11 // pred_check_branch
          %464 = sbr.rel (%p462) target = $region36
        $region35: #{klvcg_forward.1} parent=11 // pred_region
          _
        $region36: #{klvcg_forward.1} parent=11 // pred_fallthru
          _
        // Predicated region
        $region37: #{klvcg_forward.1} parent=11 // pred_check
          %p465 = pneg %p327
        $region38: #{klvcg_forward.1} parent=11 // pred_check_branch
          %467 = sbr.rel (%p465) target = $region40
        $region39: #{klvcg_forward.1} parent=11 // pred_region
          _
        $region40: #{klvcg_forward.1} parent=11 // pred_fallthru
          _
        // Predicated region
        $region41: #{klvcg_forward.1} parent=11 // pred_check
          %p468 = pneg %p348
        $region42: #{klvcg_forward.1} parent=11 // pred_check_branch
          %470 = sbr.rel (%p468) target = $region44
        $region43: #{klvcg_forward.1} parent=11 // pred_region
          _
        $region44: #{klvcg_forward.1} parent=11 // pred_fallthru
          _
        // Predicated region
        $region45: #{klvcg_forward.1} parent=11 // pred_check
          %p471 = pneg %p369
        $region46: #{klvcg_forward.1} parent=11 // pred_check_branch
          %473 = sbr.rel (%p471) target = $region48
        $region47: #{klvcg_forward.1} parent=11 // pred_region
          _
        $region48: #{klvcg_forward.1} parent=11 // pred_fallthru
          _
        // Predicated region
        $region49: #{klvcg_forward.1} parent=11 // pred_check
          %p474 = pneg %p390
        $region50: #{klvcg_forward.1} parent=11 // pred_check_branch
          %476 = sbr.rel (%p474) target = $region52
        $region51: #{klvcg_forward.1} parent=11 // pred_region
          _
        $region52: #{klvcg_forward.1} parent=11 // pred_fallthru
          _
        // Predicated region
        $region53: #{klvcg_forward.1} parent=11 // pred_check
          %p477 = pneg %p411
        $region54: #{klvcg_forward.1} parent=11 // pred_check_branch
          %479 = sbr.rel (%p477) target = $region56
        $region55: #{klvcg_forward.1} parent=11 // pred_region
          _
        $region56: #{klvcg_forward.1} parent=11 // pred_fallthru
          _
      $region12: #{klvcg_forward.1} parent=5 // pred_fallthru
        _
      %p480 = scmp.lt.s32.totalorder %s24, 2
      // Predicated region
      $region57: #{klvcg_forward.1} parent=5 // pred_check
        %p481 = pneg %p480
      $region58: #{klvcg_forward.1} parent=5 // pred_check_branch
        %483 = sbr.rel (%p481) target = $region60
      $region59: #{klvcg_forward.1} parent=5 // pred_region
        // Predicated region
        $region61: #{klvcg_forward.1} parent=59 // pred_check
          %p484 = pneg %p44
        $region62: #{klvcg_forward.1} parent=59 // pred_check_branch
          %486 = sbr.rel (%p484) target = $region64
        $region63: #{klvcg_forward.1} parent=59 // pred_region
          %p487 = scmp.lt.s32.totalorder %s24, 1
          %s488 = scalar_select %p487, %s24, 1
          %s489 = smul.addr %s488, 8
          %s490 = scalar_lea.vmem %s0, %s489
        $region64: #{klvcg_forward.1} parent=59 // pred_fallthru
          _
        // Predicated region
        $region65: #{klvcg_forward.1} parent=59 // pred_check
          %p491 = pneg %p70
        $region66: #{klvcg_forward.1} parent=59 // pred_check_branch
          %493 = sbr.rel (%p491) target = $region68
        $region67: #{klvcg_forward.1} parent=59 // pred_region
          %p494 = scmp.lt.s32.totalorder %s24, 1
          %s495 = scalar_select %p494, %s24, 1
          %s496 = smul.addr %s495, 4
          %s497 = scalar_lea.vmem %s1, %s496
        $region68: #{klvcg_forward.1} parent=59 // pred_fallthru
          _
        // Predicated region
        $region69: #{klvcg_forward.1} parent=59 // pred_check
          %p498 = pneg %p96
        $region70: #{klvcg_forward.1} parent=59 // pred_check_branch
          %500 = sbr.rel (%p498) target = $region72
        $region71: #{klvcg_forward.1} parent=59 // pred_region
          %p501 = scmp.lt.s32.totalorder %s24, 1
          %s502 = scalar_select %p501, %s24, 1
          %s503 = smul.addr %s502, 4
          %s504 = scalar_lea.vmem %s2, %s503
        $region72: #{klvcg_forward.1} parent=59 // pred_fallthru
          _
        // Predicated region
        $region73: #{klvcg_forward.1} parent=59 // pred_check
          %p505 = pneg %p122
        $region74: #{klvcg_forward.1} parent=59 // pred_check_branch
          %507 = sbr.rel (%p505) target = $region76
        $region75: #{klvcg_forward.1} parent=59 // pred_region
          %p508 = scmp.lt.s32.totalorder %s24, 1
          %s509 = scalar_select %p508, %s24, 1
          %s510 = smul.addr %s509, 2
          %s511 = smul.addr %s510, 8
          %s512 = scalar_lea.vmem %s3, %s511
        $region76: #{klvcg_forward.1} parent=59 // pred_fallthru
          _
        // Predicated region
        $region77: #{klvcg_forward.1} parent=59 // pred_check
          %p513 = pneg %p148
        $region78: #{klvcg_forward.1} parent=59 // pred_check_branch
          %515 = sbr.rel (%p513) target = $region80
        $region79: #{klvcg_forward.1} parent=59 // pred_region
          %p516 = scmp.lt.s32.totalorder %s24, 1
          %s517 = scalar_select %p516, %s24, 1
          %s518 = smul.addr %s517, 8
          %s519 = scalar_lea.vmem %s4, %s518
        $region80: #{klvcg_forward.1} parent=59 // pred_fallthru
          _
        // Predicated region
        $region81: #{klvcg_forward.1} parent=59 // pred_check
          %p520 = pneg %p174
        $region82: #{klvcg_forward.1} parent=59 // pred_check_branch
          %522 = sbr.rel (%p520) target = $region84
        $region83: #{klvcg_forward.1} parent=59 // pred_region
          %p523 = scmp.lt.s32.totalorder %s24, 1
          %s524 = scalar_select %p523, %s24, 1
          %s525 = smul.addr %s524, 8
          %s526 = scalar_lea.vmem %s5, %s525
        $region84: #{klvcg_forward.1} parent=59 // pred_fallthru
          _
      $region60: #{klvcg_forward.1} parent=5 // pred_fallthru
        _
      %p527 = scmp.le.s32.totalorder 1, %s24
      %p528 = scmp.lt.s32.totalorder %s24, 3
      %p529 = pnand %p527, %p528
      %p530 = pneg %p529
      // Predicated region
      $region85: #{klvcg_forward.1} parent=5 // pred_check
        _
      $region86: #{klvcg_forward.1} parent=5 // pred_check_branch
        %532 = sbr.rel (%p529) target = $region88
      $region87: #{klvcg_forward.1} parent=5 // pred_region
        %s533 = ssub.s32 %s24, 1
        %p534 = scmp.lt.s32.totalorder %s29, 1
        %s535 = scalar_select %p534, %s29, 1
        %s536 = smul.addr %s535, 8
        %s537 = scalar_lea.vmem %s0, %s536
        %p538 = pneg %p50
        %p539 = pneg %p47
        %p540 = scmp.lt.s32.totalorder %s29, 1
        %s541 = scalar_select %p540, %s29, 1
        %s542 = smul.addr %s541, 4
        %s543 = scalar_lea.vmem %s1, %s542
        %p544 = pneg %p76
        %p545 = pneg %p73
        %p546 = scmp.lt.s32.totalorder %s29, 1
        %s547 = scalar_select %p546, %s29, 1
        %s548 = smul.addr %s547, 4
        %s549 = scalar_lea.vmem %s2, %s548
        %p550 = pneg %p102
        %p551 = pneg %p99
        %p552 = scmp.lt.s32.totalorder %s29, 1
        %s553 = scalar_select %p552, %s29, 1
        %s554 = smul.addr %s553, 2
        %s555 = smul.addr %s554, 8
        %s556 = scalar_lea.vmem %s3, %s555
        %p557 = pneg %p128
        %p558 = pneg %p125
        %p559 = scmp.lt.s32.totalorder %s29, 1
        %s560 = scalar_select %p559, %s29, 1
        %s561 = smul.addr %s560, 8
        %s562 = scalar_lea.vmem %s4, %s561
        %p563 = pneg %p154
        %p564 = pneg %p151
        %p565 = scmp.lt.s32.totalorder %s29, 1
        %s566 = scalar_select %p565, %s29, 1
        %s567 = smul.addr %s566, 8
        %s568 = scalar_lea.vmem %s5, %s567
        %p569 = pneg %p180
        %p570 = pneg %p177
        %p571 = pneg %p201
        %p572 = pneg %p198
        %p573 = pneg %p222
        %p574 = pneg %p219
        %p575 = pneg %p243
        %p576 = pneg %p240
        %p577 = pneg %p264
        %p578 = pneg %p261
        %p579 = pneg %p285
        %p580 = pneg %p282
        %p581 = pneg %p306
        %p582 = pneg %p303
        %p583 = pneg %p327
        %p584 = pneg %p324
        %p585 = pneg %p348
        %p586 = pneg %p345
        %p587 = pneg %p369
        %p588 = pneg %p366
        %p589 = pneg %p390
        %p590 = pneg %p387
        %p591 = pneg %p411
        %p592 = pneg %p408
        %p593 = pneg %p432
        %p594 = pneg %p429
        %p595 = scmp.lt.s32.totalorder %s29, 1
        %s596 = scalar_select %p595, %s29, 1
        %s597 = smul.addr %s596, 8
        %s598 = scalar_lea.vmem %s0, %s597
        %p599 = scmp.lt.s32.totalorder %s29, 1
        %s600 = scalar_select %p599, %s29, 1
        %s601 = smul.addr %s600, 4
        %s602 = scalar_lea.vmem %s1, %s601
        %p603 = scmp.lt.s32.totalorder %s29, 1
        %s604 = scalar_select %p603, %s29, 1
        %s605 = smul.addr %s604, 4
        %s606 = scalar_lea.vmem %s2, %s605
        %p607 = scmp.lt.s32.totalorder %s29, 1
        %s608 = scalar_select %p607, %s29, 1
        %s609 = smul.addr %s608, 2
        %s610 = smul.addr %s609, 8
        %s611 = scalar_lea.vmem %s3, %s610
        %p612 = scmp.lt.s32.totalorder %s29, 1
        %s613 = scalar_select %p612, %s29, 1
        %s614 = smul.addr %s613, 8
        %s615 = scalar_lea.vmem %s4, %s614
        %p616 = scmp.lt.s32.totalorder %s29, 1
        %s617 = scalar_select %p616, %s29, 1
        %s618 = smul.addr %s617, 8
        %s619 = scalar_lea.vmem %s5, %s618
        %p620 = scmp.eq.s32.totalorder %s29, 0
        // Predicated region
        $region89: #{klvcg_forward.1} parent=87 // pred_check
          %p621 = pneg %p620
        $region90: #{klvcg_forward.1} parent=87 // pred_check_branch
          %623 = sbr.rel (%p621) target = $region92
        $region91: #{klvcg_forward.1} parent=87 // pred_region
          %vm624 = vcmask 7168
          %625 = vst.msk [vmem:[#allocation3] sm:$0xff] %vm624, 0.0
          %626 = vst.msk [vmem:[#allocation4] sm:$0xff] %vm624, 0.0
        $region92: #{klvcg_forward.1} parent=87 // pred_fallthru
          _
        %v627 = vld [vmem:[%s598] sm:$0x1f]
        %vm628 = vcmask 1044480
        %v629 = vsel %vm628, %v627, 0.0
        %630 = vadd.xlane.f32.xlu0 %v629
        %v631 = vpop.xlane.xlu0 %630
        %v632 = vmul.f32 %v631, 0.041666668
        %v633 = vmul.f32 %v627, %v627
        %v634 = vsel %vm628, %v633, 0.0
        %635 = vadd.xlane.f32.xlu0 %v634
        %v636 = vpop.xlane.xlu0 %635
        %v637 = vmul.f32 %v636, 0.041666668
        %v638 = vmul.f32 %v632, %v632
        %v639 = vsub.f32 %v637, %v638
        %v640 = vmax.f32 %v639, 0.0
        %v641 = vsub.f32 %v627, %v632
        %v642 = vadd.f32 %v640, 1e-12
        %v643 = vrsqrt.pop %v642
        %v644 = vmul.f32 %v641, %v643
        %v645 = vld [vmem:[%s6] sm:$0x1]
        %v647 = vlaneseq
        %v648 = vshrl.u32 %v647, 7
        %v649 = vsub.s32 0, %v648
        %v650 = vrot.slane %v645, %v649
        %v652 = vmul.f32 %v644, %v650
        %v653 = vld [vmem:[%s7] sm:$0x1]
        %v655 = vlaneseq
        %v656 = vshrl.u32 %v655, 7
        %v657 = vsub.s32 0, %v656
        %v658 = vrot.slane %v653, %v657
        %v660 = vadd.f32 %v652, %v658
        %v661 = vld [vmem:[%s8] sm:$0xff]
        %v662 = vld [vmem:[%s8 + $0x8] sm:$0xff]
        %v663 = vld [vmem:[%s8 + $0x10] sm:$0xff]
        %v664 = vld [vmem:[%s8 + $0x18] sm:$0xff]
        %v665 = vld [vmem:[%s8 + $0x20] sm:$0xff]
        %v666 = vld [vmem:[%s8 + $0x28] sm:$0xff]
        %v667 = vld [vmem:[%s8 + $0x30] sm:$0xff]
        %v668 = vld [vmem:[%s8 + $0x38] sm:$0xff]
        %v669 = vld [vmem:[%s8 + $0x40] sm:$0xff]
        %v670 = vld [vmem:[%s8 + $0x48] sm:$0xff]
        %v671 = vld [vmem:[%s8 + $0x50] sm:$0xff]
        %v672 = vld [vmem:[%s8 + $0x58] sm:$0xff]
        %v673 = vld [vmem:[%s8 + $0x60] sm:$0xff]
        %v674 = vld [vmem:[%s8 + $0x68] sm:$0xff]
        %v675 = vld [vmem:[%s8 + $0x70] sm:$0xff]
        %v676 = vld [vmem:[%s8 + $0x78] sm:$0xff]
        %v677 = vld [vmem:[%s9] sm:$0x1]
        %v679 = vlaneseq
        %v680 = vshrl.u32 %v679, 7
        %v681 = vsub.s32 0, %v680
        %v682 = vrot.slane %v677, %v681
        %684 = vmatprep.subr.mxu0 0.0
        %685 = vmatpush1.msra.mxu0 %v661
        %686 = vmatprep.subr.mxu0 0.0
        %687 = vmatpush1.msra.mxu0 %v662
        %688 = vmatprep.subr.mxu0 0.0
        %689 = vmatpush1.msra.mxu0 %v663
        %690 = vmatprep.subr.mxu0 0.0
        %691 = vmatpush1.msra.mxu0 %v664
        %692 = vmatprep.subr.mxu0 0.0
        %693 = vmatpush1.msra.mxu0 %v665
        %694 = vmatprep.subr.mxu0 0.0
        %695 = vmatpush1.msra.mxu0 %v666
        %696 = vmatprep.subr.mxu0 0.0
        %697 = vmatpush1.msra.mxu0 %v667
        %698 = vmatprep.subr.mxu0 0.0
        %699 = vmatpush1.msra.mxu0 %v668
        %700 = vmatprep.subr.mxu0 0.0
        %701 = vmatpush1.msra.mxu0 %v669
        %702 = vmatprep.subr.mxu0 0.0
        %703 = vmatpush1.msra.mxu0 %v670
        %704 = vmatprep.subr.mxu0 0.0
        %705 = vmatpush1.msra.mxu0 %v671
        %706 = vmatprep.subr.mxu0 0.0
        %707 = vmatpush1.msra.mxu0 %v672
        %708 = vmatprep.subr.mxu0 0.0
        %709 = vmatpush1.msra.mxu0 %v673
        %710 = vmatprep.subr.mxu0 0.0
        %711 = vmatpush1.msra.mxu0 %v674
        %712 = vmatprep.subr.mxu0 0.0
        %713 = vmatpush1.msra.mxu0 %v675
        %714 = vmatprep.subr.mxu0 0.0
        %715 = vmatpush1.msra.mxu0 %v676
        %716 = vmatprep.subr.mxu0 0.0
        %717 = vmatpush1.msra.mxu0 0.0
        %718 = vmatprep.subr.mxu0 0.0
        %719 = vmatpush1.msra.mxu0 0.0
        %720 = vmatprep.subr.mxu0 0.0
        %721 = vmatpush1.msra.mxu0 0.0
        %722 = vmatprep.subr.mxu0 0.0
        %723 = vmatpush1.msra.mxu0 0.0
        %724 = vmatprep.subr.mxu0 0.0
        %725 = vmatpush1.msra.mxu0 0.0
        %726 = vmatprep.subr.mxu0 0.0
        %727 = vmatpush1.msra.mxu0 0.0
        %728 = vmatprep.subr.mxu0 0.0
        %729 = vmatpush1.msra.mxu0 0.0
        %730 = vmatprep.subr.mxu0 0.0
        %731 = vmatpush1.msra.mxu0 0.0
        %732 = vmatprep.subr.mxu0 0.0
        %733 = vmatpush1.msra.mxu0 0.0
        %734 = vmatprep.subr.mxu0 0.0
        %735 = vmatpush1.msra.mxu0 0.0
        %736 = vmatprep.subr.mxu0 0.0
        %737 = vmatpush1.msra.mxu0 0.0
        %738 = vmatprep.subr.mxu0 0.0
        %739 = vmatpush1.msra.mxu0 0.0
        %740 = vmatprep.subr.mxu0 0.0
        %741 = vmatpush1.msra.mxu0 0.0
        %742 = vmatprep.subr.mxu0 0.0
        %743 = vmatpush1.msra.mxu0 0.0
        %744 = vmatprep.subr.mxu0 0.0
        %745 = vmatpush1.msra.mxu0 0.0
        %746 = vmatprep.subr.mxu0 0.0
        %747 = vmatpush1.msra.mxu0 0.0
        %748 = vmatprep.mubr.f32.mxu0 0.0
        %749 = vmatmul.mubr.f32.gmra.mrb[0].mxu0 %v660
        %v750 = vpop.f32.mrb[0].mxu0
        %v751 = vadd.f32 %v682, %v750
        %v752 = vpop.f32.mrb[0].mxu0
        %753 = vdwg.mxu0
        %v754 = vld [vmem:[%s602] sm:$0xf]
        %v755 = vld [vmem:[%s606] sm:$0xf]
        %v756 = vadd.f32 %v755, %v754
        %v757 = vld [vmem:[%s10] sm:$0xff]
        %v758 = vld [vmem:[%s10 + $0x8] sm:$0xff]
        %v759 = vld [vmem:[%s10 + $0x10] sm:$0xff]
        %v760 = vld [vmem:[%s10 + $0x18] sm:$0xff]
        %v761 = vld [vmem:[%s10 + $0x20] sm:$0xff]
        %v762 = vld [vmem:[%s10 + $0x28] sm:$0xff]
        %v763 = vld [vmem:[%s10 + $0x30] sm:$0xff]
        %v764 = vld [vmem:[%s10 + $0x38] sm:$0xff]
        %v765 = vld [vmem:[%s10 + $0x40] sm:$0xff]
        %v766 = vld [vmem:[%s10 + $0x48] sm:$0xff]
        %v767 = vld [vmem:[%s10 + $0x50] sm:$0xff]
        %v768 = vld [vmem:[%s10 + $0x58] sm:$0xff]
        %v769 = vld [vmem:[%s10 + $0x60] sm:$0xff]
        %v770 = vld [vmem:[%s10 + $0x68] sm:$0xff]
        %v771 = vld [vmem:[%s10 + $0x70] sm:$0xff]
        %v772 = vld [vmem:[%s10 + $0x78] sm:$0xff]
        %v773 = vld [vmem:[%s11] sm:$0x1]
        %v775 = vlaneseq
        %v776 = vshrl.u32 %v775, 7
        %v777 = vsub.s32 0, %v776
        %v778 = vrot.slane %v773, %v777
        %780 = vmatprep.subr.mxu0 0.0
        %781 = vmatpush1.msra.mxu0 %v757
        %782 = vmatprep.subr.mxu0 0.0
        %783 = vmatpush1.msra.mxu0 %v758
        %784 = vmatprep.subr.mxu0 0.0
        %785 = vmatpush1.msra.mxu0 %v759
        %786 = vmatprep.subr.mxu0 0.0
        %787 = vmatpush1.msra.mxu0 %v760
        %788 = vmatprep.subr.mxu0 0.0
        %789 = vmatpush1.msra.mxu0 %v761
        %790 = vmatprep.subr.mxu0 0.0
        %791 = vmatpush1.msra.mxu0 %v762
        %792 = vmatprep.subr.mxu0 0.0
        %793 = vmatpush1.msra.mxu0 %v763
        %794 = vmatprep.subr.mxu0 0.0
        %795 = vmatpush1.msra.mxu0 %v764
        %796 = vmatprep.subr.mxu0 0.0
        %797 = vmatpush1.msra.mxu0 %v765
        %798 = vmatprep.subr.mxu0 0.0
        %799 = vmatpush1.msra.mxu0 %v766
        %800 = vmatprep.subr.mxu0 0.0
        %801 = vmatpush1.msra.mxu0 %v767
        %802 = vmatprep.subr.mxu0 0.0
        %803 = vmatpush1.msra.mxu0 %v768
        %804 = vmatprep.subr.mxu0 0.0
        %805 = vmatpush1.msra.mxu0 %v769
        %806 = vmatprep.subr.mxu0 0.0
        %807 = vmatpush1.msra.mxu0 %v770
        %808 = vmatprep.subr.mxu0 0.0
        %809 = vmatpush1.msra.mxu0 %v771
        %810 = vmatprep.subr.mxu0 0.0
        %811 = vmatpush1.msra.mxu0 %v772
        %812 = vmatprep.subr.mxu0 0.0
        %813 = vmatpush1.msra.mxu0 0.0
        %814 = vmatprep.subr.mxu0 0.0
        %815 = vmatpush1.msra.mxu0 0.0
        %816 = vmatprep.subr.mxu0 0.0
        %817 = vmatpush1.msra.mxu0 0.0
        %818 = vmatprep.subr.mxu0 0.0
        %819 = vmatpush1.msra.mxu0 0.0
        %820 = vmatprep.subr.mxu0 0.0
        %821 = vmatpush1.msra.mxu0 0.0
        %822 = vmatprep.subr.mxu0 0.0
        %823 = vmatpush1.msra.mxu0 0.0
        %824 = vmatprep.subr.mxu0 0.0
        %825 = vmatpush1.msra.mxu0 0.0
        %826 = vmatprep.subr.mxu0 0.0
        %827 = vmatpush1.msra.mxu0 0.0
        %828 = vmatprep.subr.mxu0 0.0
        %829 = vmatpush1.msra.mxu0 0.0
        %830 = vmatprep.subr.mxu0 0.0
        %831 = vmatpush1.msra.mxu0 0.0
        %832 = vmatprep.subr.mxu0 0.0
        %833 = vmatpush1.msra.mxu0 0.0
        %834 = vmatprep.subr.mxu0 0.0
        %835 = vmatpush1.msra.mxu0 0.0
        %836 = vmatprep.subr.mxu0 0.0
        %837 = vmatpush1.msra.mxu0 0.0
        %838 = vmatprep.subr.mxu0 0.0
        %839 = vmatpush1.msra.mxu0 0.0
        %840 = vmatprep.subr.mxu0 0.0
        %841 = vmatpush1.msra.mxu0 0.0
        %842 = vmatprep.subr.mxu0 0.0
        %843 = vmatpush1.msra.mxu0 0.0
        %844 = vmatprep.mubr.f32.mxu0 0.0
        %845 = vmatmul.mubr.f32.gmra.mrb[0].mxu0 %v756
        %v846 = vpop.f32.mrb[0].mxu0
        %v847 = vadd.f32 %v778, %v846
        %v848 = vpop.f32.mrb[0].mxu0
        %849 = vdwg.mxu0
        %v850 = vsel %vm628, %v751, 0.0
        %v851 = vrot.slane %v850, 4
        %v852 = vadd.f32 %v850, %v851
        %v853 = vrot.slane %v852, 2
        %v854 = vadd.f32 %v852, %v853
        %v855 = vrot.slane %v854, 1
        %v856 = vadd.f32 %v854, %v855
        %vm857 = vcmask 1043456
        %v858 = vsel %vm857, %v754, 0.0
        %v859 = vrot.slane %v858, 4
        %v860 = vadd.f32 %v858, %v859
        %v861 = vrot.slane %v860, 2
        %v862 = vadd.f32 %v860, %v861
        %v863 = vrot.slane %v862, 1
        %v864 = vadd.f32 %v862, %v863
        %v865 = vadd.f32 %v856, %v864
        %v866 = vsel %vm857, %v847, 0.0
        %v867 = vrot.slane %v866, 4
        %v868 = vadd.f32 %v866, %v867
        %v869 = vrot.slane %v868, 2
        %v870 = vadd.f32 %v868, %v869
        %v871 = vrot.slane %v870, 1
        %v872 = vadd.f32 %v870, %v871
        %v873 = vadd.f32 %v865, %v872
        %v874 = vmul.f32 %v873, 0.07692308
        %875 = vst [vmem:[#allocation2] sm:$0x1] %v874
        %876 = vst [vmem:[#allocation2 + $0x1] sm:$0x1f] %v751
        %877 = vst [vmem:[#allocation2 + $0x6] sm:$0xf] %v754
        %878 = vst [vmem:[#allocation2 + $0xa] sm:$0xf] %v847
        %v879 = vld [vmem:[#allocation2] sm:$0xff]
        %v880 = vld [vmem:[#allocation2 + $0x8] sm:$0x3f]
        %v881 = vld [vmem:[%s611] sm:$0xff]
        %v882 = vld [vmem:[%s611 + $0x8] sm:$0x3f]
        %v883 = vadd.f32 %v879, %v881
        %v884 = vadd.f32 %v880, %v882
        %885 = vadd.xlane.f32.xlu0 %v883
        %v886 = vpop.xlane.xlu0 %885
        %vm887 = vcmask 1045504
        %v888 = vsel %vm887, %v884, 0.0
        %889 = vadd.xlane.f32.xlu0 %v888
        %v890 = vpop.xlane.xlu0 %889
        %v891 = vmul.f32 %v886, 0.03125
        %v892 = vmul.f32 %v890, 0.03125
        %v893 = vmul.f32 %v883, %v883
        %v894 = vmul.f32 %v884, %v884
        %895 = vadd.xlane.f32.xlu0 %v893
        %v896 = vpop.xlane.xlu0 %895
        %v897 = vsel %vm887, %v894, 0.0
        %898 = vadd.xlane.f32.xlu0 %v897
        %v899 = vpop.xlane.xlu0 %898
        %v900 = vmul.f32 %v896, 0.03125
        %v901 = vmul.f32 %v899, 0.03125
        %v902 = vmul.f32 %v891, %v891
        %v903 = vmul.f32 %v892, %v892
        %v904 = vsub.f32 %v900, %v902
        %v905 = vsub.f32 %v901, %v903
        %v906 = vmax.f32 %v904, 0.0
        %v907 = vmax.f32 %v905, 0.0
        %v908 = vsub.f32 %v883, %v891
        %v909 = vsub.f32 %v884, %v892
        %v910 = vadd.f32 %v906, 1e-12
        %v911 = vadd.f32 %v907, 1e-12
        %v912 = vrsqrt.pop %v910
        %v913 = vrsqrt.pop %v911
        %v914 = vmul.f32 %v908, %v912
        %v915 = vmul.f32 %v909, %v913
        %v916 = vld [vmem:[%s12] sm:$0x1]
        %v918 = vlaneseq
        %v919 = vshrl.u32 %v918, 7
        %v920 = vsub.s32 0, %v919
        %v921 = vrot.slane %v916, %v920
        %v923 = vmul.f32 %v914, %v921
        %v924 = vmul.f32 %v915, %v921
        %v925 = vld [vmem:[%s13] sm:$0x1]
        %v927 = vlaneseq
        %v928 = vshrl.u32 %v927, 7
        %v929 = vsub.s32 0, %v928
        %v930 = vrot.slane %v925, %v929
        %v932 = vadd.f32 %v923, %v930
        %v933 = vadd.f32 %v924, %v930
        %v934 = vld [vmem:[%s14] sm:$0xff]
        %v935 = vld [vmem:[%s14 + $0x8] sm:$0xff]
        %v936 = vld [vmem:[%s14 + $0x10] sm:$0xff]
        %v937 = vld [vmem:[%s14 + $0x18] sm:$0xff]
        %v938 = vld [vmem:[%s14 + $0x20] sm:$0xff]
        %v939 = vld [vmem:[%s14 + $0x28] sm:$0xff]
        %v940 = vld [vmem:[%s14 + $0x30] sm:$0xff]
        %v941 = vld [vmem:[%s14 + $0x38] sm:$0xff]
        %v942 = vld [vmem:[%s14 + $0x40] sm:$0xff]
        %v943 = vld [vmem:[%s14 + $0x48] sm:$0xff]
        %v944 = vld [vmem:[%s14 + $0x50] sm:$0xff]
        %v945 = vld [vmem:[%s14 + $0x58] sm:$0xff]
        %v946 = vld [vmem:[%s14 + $0x60] sm:$0xff]
        %v947 = vld [vmem:[%s14 + $0x68] sm:$0xff]
        %v948 = vld [vmem:[%s14 + $0x70] sm:$0xff]
        %v949 = vld [vmem:[%s14 + $0x78] sm:$0xff]
        %v950 = vld [vmem:[%s15] sm:$0x1]
        %v952 = vlaneseq
        %v953 = vshrl.u32 %v952, 7
        %v954 = vsub.s32 0, %v953
        %v955 = vrot.slane %v950, %v954
        %957 = vmatprep.subr.mxu0 0.0
        %958 = vmatpush1.msra.mxu0 %v934
        %959 = vmatprep.subr.mxu0 0.0
        %960 = vmatpush1.msra.mxu0 %v935
        %961 = vmatprep.subr.mxu0 0.0
        %962 = vmatpush1.msra.mxu0 %v936
        %963 = vmatprep.subr.mxu0 0.0
        %964 = vmatpush1.msra.mxu0 %v937
        %965 = vmatprep.subr.mxu0 0.0
        %966 = vmatpush1.msra.mxu0 %v938
        %967 = vmatprep.subr.mxu0 0.0
        %968 = vmatpush1.msra.mxu0 %v939
        %969 = vmatprep.subr.mxu0 0.0
        %970 = vmatpush1.msra.mxu0 %v940
        %971 = vmatprep.subr.mxu0 0.0
        %972 = vmatpush1.msra.mxu0 %v941
        %973 = vmatprep.subr.mxu0 0.0
        %974 = vmatpush1.msra.mxu0 %v942
        %975 = vmatprep.subr.mxu0 0.0
        %976 = vmatpush1.msra.mxu0 %v943
        %977 = vmatprep.subr.mxu0 0.0
        %978 = vmatpush1.msra.mxu0 %v944
        %979 = vmatprep.subr.mxu0 0.0
        %980 = vmatpush1.msra.mxu0 %v945
        %981 = vmatprep.subr.mxu0 0.0
        %982 = vmatpush1.msra.mxu0 %v946
        %983 = vmatprep.subr.mxu0 0.0
        %984 = vmatpush1.msra.mxu0 %v947
        %985 = vmatprep.subr.mxu0 0.0
        %986 = vmatpush1.msra.mxu0 %v948
        %987 = vmatprep.subr.mxu0 0.0
        %988 = vmatpush1.msra.mxu0 %v949
        %989 = vmatprep.subr.mxu0 0.0
        %990 = vmatpush1.msra.mxu0 0.0
        %991 = vmatprep.subr.mxu0 0.0
        %992 = vmatpush1.msra.mxu0 0.0
        %993 = vmatprep.subr.mxu0 0.0
        %994 = vmatpush1.msra.mxu0 0.0
        %995 = vmatprep.subr.mxu0 0.0
        %996 = vmatpush1.msra.mxu0 0.0
        %997 = vmatprep.subr.mxu0 0.0
        %998 = vmatpush1.msra.mxu0 0.0
        %999 = vmatprep.subr.mxu0 0.0
        %1000 = vmatpush1.msra.mxu0 0.0
        %1001 = vmatprep.subr.mxu0 0.0
        %1002 = vmatpush1.msra.mxu0 0.0
        %1003 = vmatprep.subr.mxu0 0.0
        %1004 = vmatpush1.msra.mxu0 0.0
        %1005 = vmatprep.subr.mxu0 0.0
        %1006 = vmatpush1.msra.mxu0 0.0
        %1007 = vmatprep.subr.mxu0 0.0
        %1008 = vmatpush1.msra.mxu0 0.0
        %1009 = vmatprep.subr.mxu0 0.0
        %1010 = vmatpush1.msra.mxu0 0.0
        %1011 = vmatprep.subr.mxu0 0.0
        %1012 = vmatpush1.msra.mxu0 0.0
        %1013 = vmatprep.subr.mxu0 0.0
        %1014 = vmatpush1.msra.mxu0 0.0
        %1015 = vmatprep.subr.mxu0 0.0
        %1016 = vmatpush1.msra.mxu0 0.0
        %1017 = vmatprep.subr.mxu0 0.0
        %1018 = vmatpush1.msra.mxu0 0.0
        %1019 = vmatprep.subr.mxu0 0.0
        %1020 = vmatpush1.msra.mxu0 0.0
        %1021 = vmatprep.mubr.f32.mxu0 0.0
        %1022 = vmatmul.mubr.f32.gmra.mrb[0].mxu0 %v932
        %v1023 = vpop.f32.mrb[0].mxu0
        %v1024 = vadd.f32 %v955, %v1023
        %v1025 = vpop.f32.mrb[0].mxu0
        %1026 = vmatprep.mubr.f32.mxu0 0.0
        %1027 = vmatmul.mubr.f32.gmra.mrb[0].mxu0 %v933
        %v1028 = vpop.f32.mrb[0].mxu0
        %v1029 = vadd.f32 %v955, %v1028
        %v1030 = vpop.f32.mrb[0].mxu0
        %1031 = vdwg.mxu0
        %v1032 = vsel %vm887, %v1029, 0.0
        %v1033 = vadd.f32 %v1024, %v1032
        %v1034 = vrot.slane %v1033, 4
        %v1035 = vadd.f32 %v1033, %v1034
        %v1036 = vrot.slane %v1035, 2
        %v1037 = vadd.f32 %v1035, %v1036
        %v1038 = vrot.slane %v1037, 1
        %v1039 = vadd.f32 %v1037, %v1038
        %v1040 = vrcp.pop 14.0
        %v1041 = vmul.f32 %v1039, %v1040
        %v1042 = vld [vmem:[%s615] sm:$0xff]
        %v1043 = vadd.f32 %v1042, %v1041
        %v1044 = vld [vmem:[%s16] sm:$0xff]
        %v1045 = vld [vmem:[%s16 + $0x8] sm:$0xff]
        %v1046 = vld [vmem:[%s16 + $0x10] sm:$0xff]
        %v1047 = vld [vmem:[%s16 + $0x18] sm:$0xff]
        %v1048 = vld [vmem:[%s16 + $0x20] sm:$0xff]
        %v1049 = vld [vmem:[%s16 + $0x28] sm:$0xff]
        %v1050 = vld [vmem:[%s16 + $0x30] sm:$0xff]
        %v1051 = vld [vmem:[%s16 + $0x38] sm:$0xff]
        %v1052 = vld [vmem:[%s16 + $0x40] sm:$0xff]
        %v1053 = vld [vmem:[%s16 + $0x48] sm:$0xff]
        %v1054 = vld [vmem:[%s16 + $0x50] sm:$0xff]
        %v1055 = vld [vmem:[%s16 + $0x58] sm:$0xff]
        %v1056 = vld [vmem:[%s16 + $0x60] sm:$0xff]
        %v1057 = vld [vmem:[%s16 + $0x68] sm:$0xff]
        %v1058 = vld [vmem:[%s16 + $0x70] sm:$0xff]
        %v1059 = vld [vmem:[%s16 + $0x78] sm:$0xff]
        %1060 = vmatprep.subr.mxu0 0.0
        %1061 = vmatpush1.xpose.msra.mxu0 %v1044
        %1062 = vmatprep.subr.mxu0 0.0
        %1063 = vmatpush1.xpose.msra.mxu0 %v1045
        %1064 = vmatprep.subr.mxu0 0.0
        %1065 = vmatpush1.xpose.msra.mxu0 %v1046
        %1066 = vmatprep.subr.mxu0 0.0
        %1067 = vmatpush1.xpose.msra.mxu0 %v1047
        %1068 = vmatprep.subr.mxu0 0.0
        %1069 = vmatpush1.xpose.msra.mxu0 %v1048
        %1070 = vmatprep.subr.mxu0 0.0
        %1071 = vmatpush1.xpose.msra.mxu0 %v1049
        %1072 = vmatprep.subr.mxu0 0.0
        %1073 = vmatpush1.xpose.msra.mxu0 %v1050
        %1074 = vmatprep.subr.mxu0 0.0
        %1075 = vmatpush1.xpose.msra.mxu0 %v1051
        %1076 = vmatprep.subr.mxu0 0.0
        %1077 = vmatpush1.xpose.msra.mxu0 %v1052
        %1078 = vmatprep.subr.mxu0 0.0
        %1079 = vmatpush1.xpose.msra.mxu0 %v1053
        %1080 = vmatprep.subr.mxu0 0.0
        %1081 = vmatpush1.xpose.msra.mxu0 %v1054
        %1082 = vmatprep.subr.mxu0 0.0
        %1083 = vmatpush1.xpose.msra.mxu0 %v1055
        %1084 = vmatprep.subr.mxu0 0.0
        %1085 = vmatpush1.xpose.msra.mxu0 %v1056
        %1086 = vmatprep.subr.mxu0 0.0
        %1087 = vmatpush1.xpose.msra.mxu0 %v1057
        %1088 = vmatprep.subr.mxu0 0.0
        %1089 = vmatpush1.xpose.msra.mxu0 %v1058
        %1090 = vmatprep.subr.mxu0 0.0
        %1091 = vmatpush1.xpose.msra.mxu0 %v1059
        %1092 = vmatprep.subr.mxu0 0.0
        %1093 = vmatpush1.xpose.msra.mxu0 0.0
        %1094 = vmatprep.subr.mxu0 0.0
        %1095 = vmatpush1.xpose.msra.mxu0 0.0
        %1096 = vmatprep.subr.mxu0 0.0
        %1097 = vmatpush1.xpose.msra.mxu0 0.0
        %1098 = vmatprep.subr.mxu0 0.0
        %1099 = vmatpush1.xpose.msra.mxu0 0.0
        %1100 = vmatprep.subr.mxu0 0.0
        %1101 = vmatpush1.xpose.msra.mxu0 0.0
        %1102 = vmatprep.subr.mxu0 0.0
        %1103 = vmatpush1.xpose.msra.mxu0 0.0
        %1104 = vmatprep.subr.mxu0 0.0
        %1105 = vmatpush1.xpose.msra.mxu0 0.0
        %1106 = vmatprep.subr.mxu0 0.0
        %1107 = vmatpush1.xpose.msra.mxu0 0.0
        %1108 = vmatprep.subr.mxu0 0.0
        %1109 = vmatpush1.xpose.msra.mxu0 0.0
        %1110 = vmatprep.subr.mxu0 0.0
        %1111 = vmatpush1.xpose.msra.mxu0 0.0
        %1112 = vmatprep.subr.mxu0 0.0
        %1113 = vmatpush1.xpose.msra.mxu0 0.0
        %1114 = vmatprep.subr.mxu0 0.0
        %1115 = vmatpush1.xpose.msra.mxu0 0.0
        %1116 = vmatprep.subr.mxu0 0.0
        %1117 = vmatpush1.xpose.msra.mxu0 0.0
        %1118 = vmatprep.subr.mxu0 0.0
        %1119 = vmatpush1.xpose.msra.mxu0 0.0
        %1120 = vmatprep.subr.mxu0 0.0
        %1121 = vmatpush1.xpose.msra.mxu0 0.0
        %1122 = vmatprep.subr.mxu0 0.0
        %1123 = vmatpush1.xpose.msra.mxu0 0.0
        %1124 = vmatprep.mubr.f32.mxu0 0.0
        %1125 = vmatmul.mubr.f32.gmra.mrb[0].mxu0 %v1043
        %v1126 = vpop.f32.mrb[0].mxu0
        %v1127 = vadd.f32 0.0, %v1126
        %v1128 = vpop.f32.mrb[0].mxu0
        %1129 = vdwg.mxu0
        %v1130 = vld [vmem:[%s619] sm:$0xff]
        %1131 = vmax.xlane.f32.xlu0 %v1127
        %v1132 = vpop.xlane.xlu0 %1131
        %v1133 = vsub.f32 %v1127, %v1132
        %v1134 = vmul.f32 %v1133, 1.442695
        %v1135 = vpow.pop %v1134
        %1136 = vadd.xlane.f32.xlu0 %v1135
        %v1137 = vpop.xlane.xlu0 %1136
        %v1138 = vlog2.pop %v1137
        %v1139 = vmul.f32 %v1138, 0.6931472
        %v1140 = vadd.f32 %v1139, %v1132
        %v1141 = vlaneseq
        %v1142 = vand.u32 %v1141, 127
        %1143 = vset.pattern.permute.xlu0 0
        %1144 = vperm.xlu0 %1143, %v1130
        %v1145 = vpop.permute.xlu0 %1144
        %vm1146 = vcmp.eq.s32.totalorder %v1142, %v1145
        %v1147 = vsel %vm1146, %v1127, 0.0
        %1148 = vadd.xlane.f32.xlu0 %v1147
        %v1149 = vpop.xlane.xlu0 %1148
        %vm1150 = vcmp.ne.s32.totalorder %v1130, 0
        %v1151 = vsel %vm1150, 1, 0
        %v1152 = vcvt.s32.f32 %v1151
        %v1153 = vld [vmem:[#allocation3] sm:$0xff]
        %v1154 = vsub.f32 %v1140, %v1149
        %v1155 = vmul.f32 %v1154, %v1152
        %v1156 = vadd.f32 %v1153, %v1155
        %vm1157 = vcmask 7168
        %1158 = vst.msk [vmem:[#allocation3] sm:$0xff] %vm1157, %v1156
        %v1159 = vld [vmem:[#allocation4] sm:$0xff]
        %v1160 = vadd.f32 %v1159, %v1152
        %1161 = vst.msk [vmem:[#allocation4] sm:$0xff] %vm1157, %v1160
        %p1162 = scmp.eq.s32.totalorder %s29, 1
        // Predicated region
        $region93: #{klvcg_forward.1} parent=87 // pred_check
          %p1163 = pneg %p1162
        $region94: #{klvcg_forward.1} parent=87 // pred_check_branch
          %1165 = sbr.rel (%p1163) target = $region96
        $region95: #{klvcg_forward.1} parent=87 // pred_region
          %v1166 = vld [vmem:[#allocation3] sm:$0xff]
          %v1167 = vsel %vm1157, %v1166, 0.0
          %1168 = vadd.xlane.f32.xlu0 %v1167
          %v1169 = vpop.xlane.xlu0 %1168
          %v1170 = vrot.slane %v1169, 4
          %v1171 = vadd.f32 %v1169, %v1170
          %v1172 = vrot.slane %v1171, 2
          %v1173 = vadd.f32 %v1171, %v1172
          %v1174 = vrot.slane %v1173, 1
          %v1175 = vadd.f32 %v1173, %v1174
          %s1176 = vtos %v1175
          %v1177 = vstv %s1176
          %v1178 = vld [vmem:[#allocation4] sm:$0xff]
          %v1179 = vsel %vm1157, %v1178, 0.0
          %1180 = vadd.xlane.f32.xlu0 %v1179
          %v1181 = vpop.xlane.xlu0 %1180
          %v1182 = vrot.slane %v1181, 4
          %v1183 = vadd.f32 %v1181, %v1182
          %v1184 = vrot.slane %v1183, 2
          %v1185 = vadd.f32 %v1183, %v1184
          %v1186 = vrot.slane %v1185, 1
          %v1187 = vadd.f32 %v1185, %v1186
          %s1188 = vtos %v1187
          %v1189 = vstv %s1188
          %v1190 = vrcp.pop %v1189
          %v1191 = vmul.f32 %v1177, %v1190
          %vm1192 = vcmask 0
          %1193 = vst.msk [vmem:[#allocation5] sm:$0x1] %vm1192, %v1191
        $region96: #{klvcg_forward.1} parent=87 // pred_fallthru
          _
        // Predicated region
        $region97: #{klvcg_forward.1} parent=87 // pred_check
          %p1194 = pneg %p429
        $region98: #{klvcg_forward.1} parent=87 // pred_check_branch
          %1196 = sbr.rel (%p1194) target = $region100
        $region99: #{klvcg_forward.1} parent=87 // pred_region
          %s1198 = ssub.s32 16, 16
          %1199 = vsyncadd [#allocation6], %s1198
          %s1201 = sshll.u32 [#allocation5], 4
          %s1202 = int_to_ptr.vmem [resolvable:$true] %s1201
          %1204 = dma.vmem_to_hbm [thread:$0]  %s1202, 16, %s17, [#allocation6]
        $region100: #{klvcg_forward.1} parent=87 // pred_fallthru
          _
        // Predicated region
        $region101: #{klvcg_forward.1} parent=87 // pred_check
          %p1205 = pneg %p429
        $region102: #{klvcg_forward.1} parent=87 // pred_check_branch
          %1207 = sbr.rel (%p1205) target = $region104
        $region103: #{klvcg_forward.1} parent=87 // pred_region
          %1208 = dma.done [#allocation6], 16
        $region104: #{klvcg_forward.1} parent=87 // pred_fallthru
          _
      $region88: #{klvcg_forward.1} parent=5 // pred_fallthru
        _
      %p1209 = scmp.le.s32.totalorder 2, %s24
      // Predicated region
      $region105: #{klvcg_forward.1} parent=5 // pred_check
        %p1210 = pneg %p1209
      $region106: #{klvcg_forward.1} parent=5 // pred_check_branch
        %1212 = sbr.rel (%p1210) target = $region108
      $region107: #{klvcg_forward.1} parent=5 // pred_region
        %s1213 = ssub.s32 %s24, 2
      $region108: #{klvcg_forward.1} parent=5 // pred_fallthru
        _
    $region6: #{klvcg_forward.1} parent=1 // loop_footer
      %s28 = sadd.s32 1, %s24
    $region7: #{klvcg_forward.1} parent=1 // loop_footer_branch
      %23 = sbr.rel target = $region3
    $region8: #{klvcg_forward.1} parent=1 // loop_exit
      _
    %1214 = vsyncpa [#allocation6], 1
    %s1215 = scalar_lea.sflag [#allocation6], 1
    %1216 = vsyncpa %s1215, 1

</llo_original>
